<compile_context>
chip_gen: v7x
topology: tpu7x:2x2x1
jax: 0.10.0
libtpu: 0.0.40
codegen_flags: <defaults>
</compile_context>

<pallas_src>
import jax
import jax.numpy as jnp
from jax.experimental import pallas as pl
from jax.experimental.pallas import tpu as pltpu

# ----- synthetic small config (ViT-S/14+reg semantics, tiny sizes) -----
PATCH = 14          # dinov2 patch size
IMG = 28            # 2x2 patch grid
IN_CH = 3
EMBED = 32
DEPTH = 2
HEADS = 2
HEAD_DIM = EMBED // HEADS
MLP_HIDDEN = EMBED * 4
NUM_REG = 4         # register tokens
LN_EPS = 1e-6
LS_INIT = 1e-5      # LayerScale init (as in dinov2_vits14_reg)

GRID_H = IMG // PATCH
N_PATCHES = GRID_H * GRID_H
SEQ = 1 + NUM_REG + N_PATCHES           # cls + registers + patches
CPP = IN_CH * PATCH * PATCH             # flattened patch length

# ----- packed small-vector layout: one (DEPTH, VEC_ROWS, 128) f32 array -----
VEC_LANES = 128
VEC_LN1_G, VEC_LN1_B, VEC_PROJ_B, VEC_LS1 = 0, 1, 2, 3
VEC_LN2_G, VEC_LN2_B, VEC_FC2_B, VEC_LS2 = 4, 5, 6, 7
VEC_FC1_B = 8
VEC_QB = 9                    # rows 9 .. 9+HEADS-1   (q bias, scale folded in)
VEC_KB = VEC_QB + HEADS       # k bias
VEC_VB = VEC_KB + HEADS       # v bias
VEC_ROWS = 16
assert VEC_VB + HEADS <= VEC_ROWS
assert MLP_HIDDEN <= VEC_LANES and EMBED <= VEC_LANES


# ---------------------------------------------------------------------------
# Fused Pallas kernel: grid = (batch,) ; depth loop is in-kernel
# ---------------------------------------------------------------------------
def _layernorm_f32(v, g, b):
    mu = jnp.mean(v, axis=-1, keepdims=True)
    var = jnp.mean(jnp.square(v - mu), axis=-1, keepdims=True)
    return (v - mu) * jax.lax.rsqrt(var + LN_EPS) * g + b


def _dinov2_kernel(patches_ref, patch_w_ref, base_ref,
                   qkv_w_ref, proj_w_ref, fc1_w_ref, fc2_w_ref,
                   vecs_ref, norm_gb_ref,
                   out_ref,
                   x_scratch):
    # ---- patch-embed matmul + cls/reg/pos assembly (rows 0..NUM_REG are 0) ----
    tok = jnp.dot(patches_ref[0], patch_w_ref[...],
                  preferred_element_type=jnp.float32)            # (SEQ, EMBED) f32
    x_scratch[...] = tok + base_ref[...]                         # cls/reg/pos/bias

    # ---- transformer blocks: in-kernel depth loop, x resident in VMEM ----
    @pl.loop(0, DEPTH)
    def _block(d):
        def vrow(row, width=EMBED):                              # (1, width) f32
            return vecs_ref[d, row:row + 1, 0:width]

        x = x_scratch[...]                                       # (SEQ, EMBED) f32

        # --- attention branch: LN -> per-head QKV -> softmax -> K-split proj ---
        hb = _layernorm_f32(x, vrow(VEC_LN1_G), vrow(VEC_LN1_B)).astype(jnp.bfloat16)
        attn = jnp.broadcast_to(vrow(VEC_PROJ_B), (SEQ, EMBED))  # init with proj bias
        for hh in range(HEADS):                                  # static unroll
            w_idx = (d * HEADS + hh) * 3
            q = jnp.dot(hb, qkv_w_ref[w_idx],
                        preferred_element_type=jnp.float32) + vrow(VEC_QB + hh, HEAD_DIM)
            k = jnp.dot(hb, qkv_w_ref[w_idx + 1],
                        preferred_element_type=jnp.float32) + vrow(VEC_KB + hh, HEAD_DIM)
            v = jnp.dot(hb, qkv_w_ref[w_idx + 2],
                        preferred_element_type=jnp.float32) + vrow(VEC_VB + hh, HEAD_DIM)
            s = jax.lax.dot_general(q, k, (((1,), (1,)), ((), ())),
                                    preferred_element_type=jnp.float32)  # (SEQ, SEQ)
            s = s - jnp.max(s, axis=-1, keepdims=True)
            p = jnp.exp(s)
            p = p * pl.reciprocal(jnp.sum(p, axis=-1, keepdims=True), approx=True)
            o_h = jnp.dot(p, v, preferred_element_type=jnp.float32)      # (SEQ, Dh)
            # fold the output projection per head (K-split) -> no lane concat
            attn = attn + jnp.dot(o_h.astype(jnp.bfloat16),
                                  proj_w_ref[d * HEADS + hh],
                                  preferred_element_type=jnp.float32)
        x = x + attn * vrow(VEC_LS1)                             # LayerScale + residual

        # --- MLP branch ---
        h2 = _layernorm_f32(x, vrow(VEC_LN2_G), vrow(VEC_LN2_B))
        h2 = jnp.dot(h2.astype(jnp.bfloat16), fc1_w_ref[d],
                     preferred_element_type=jnp.float32) + vrow(VEC_FC1_B, MLP_HIDDEN)
        h2 = jax.nn.gelu(h2, approximate=True)                   # tanh form (EUP)
        h2 = jnp.dot(h2.astype(jnp.bfloat16), fc2_w_ref[d],
                     preferred_element_type=jnp.float32) + vrow(VEC_FC2_B)
        x = x + h2 * vrow(VEC_LS2)
        x_scratch[...] = x

    # ---- final LayerNorm on patch rows only; cls/reg dropped in-kernel ----
    xp = x_scratch[1 + NUM_REG:, :]                              # (N_PATCHES, EMBED)
    y = _layernorm_f32(xp, norm_gb_ref[0:1, 0:EMBED], norm_gb_ref[1:2, 0:EMBED])
    out_ref[0] = y.astype(out_ref.dtype)


# ---------------------------------------------------------------------------
# Parameter init (deterministic, synthetic) - torch-like layout
# ---------------------------------------------------------------------------
def init_params(key):
    keys = iter(jax.random.split(key, 64))

    def nrm(shape, std=0.02):
        return jax.random.normal(next(keys), shape, jnp.float32) * std

    p = {
        "patch_w": nrm((CPP, EMBED)),        # conv weight flattened (C*P*P, EMBED)
        "patch_b": nrm((EMBED,), 0.01),
        "cls_token": nrm((1, 1, EMBED)),
        "reg_tokens": nrm((1, NUM_REG, EMBED)),
        "pos_embed": nrm((1, 1 + N_PATCHES, EMBED)),   # cls + patches (no regs)
        "norm_g": jnp.ones((EMBED,), jnp.float32),
        "norm_b": jnp.zeros((EMBED,), jnp.float32),
        "blocks": [],
    }
    for _ in range(DEPTH):
        p["blocks"].append({
            "ln1_g": jnp.ones((EMBED,), jnp.float32),
            "ln1_b": jnp.zeros((EMBED,), jnp.float32),
            "qkv_w": nrm((EMBED, 3 * EMBED)),
            "qkv_b": nrm((3 * EMBED,), 0.01),
            "proj_w": nrm((EMBED, EMBED)),
            "proj_b": nrm((EMBED,), 0.01),
            "ls1": jnp.full((EMBED,), LS_INIT, jnp.float32),
            "ln2_g": jnp.ones((EMBED,), jnp.float32),
            "ln2_b": jnp.zeros((EMBED,), jnp.float32),
            "fc1_w": nrm((EMBED, MLP_HIDDEN)),
            "fc1_b": nrm((MLP_HIDDEN,), 0.01),
            "fc2_w": nrm((MLP_HIDDEN, EMBED)),
            "fc2_b": nrm((EMBED,), 0.01),
            "ls2": jnp.full((EMBED,), LS_INIT, jnp.float32),
        })
    return p


# ---------------------------------------------------------------------------
# One-time parameter packing (bf16 MXU weights, per-head split, vector packing)
# ---------------------------------------------------------------------------
def pack_params(params):
    scale = HEAD_DIM ** -0.5
    pos = params["pos_embed"][0]                                   # (1+N, D)
    base = jnp.concatenate([
        params["cls_token"][0] + pos[:1],                          # cls + pos[0]
        params["reg_tokens"][0],                                   # regs (no pos)
        pos[1:] + params["patch_b"][None, :],                      # pos + conv bias
    ], axis=0)                                                     # (SEQ, D) f32

    qkv_w_heads, proj_w_heads, fc1_w, fc2_w, vecs = [], [], [], [], []
    for blk in params["blocks"]:
        vec_entries = [
            (VEC_LN1_G, blk["ln1_g"]), (VEC_LN1_B, blk["ln1_b"]),
            (VEC_PROJ_B, blk["proj_b"]), (VEC_LS1, blk["ls1"]),
            (VEC_LN2_G, blk["ln2_g"]), (VEC_LN2_B, blk["ln2_b"]),
            (VEC_FC2_B, blk["fc2_b"]), (VEC_LS2, blk["ls2"]),
            (VEC_FC1_B, blk["fc1_b"]),
        ]
        for hh in range(HEADS):
            lo, hi = hh * HEAD_DIM, (hh + 1) * HEAD_DIM
            # q gets the 1/sqrt(Dh) scale folded in (weight + bias)
            qkv_w_heads += [blk["qkv_w"][:, lo:hi] * scale,
                            blk["qkv_w"][:, EMBED + lo:EMBED + hi],
                            blk["qkv_w"][:, 2 * EMBED + lo:2 * EMBED + hi]]
            proj_w_heads.append(blk["proj_w"][lo:hi, :])
            vec_entries += [
                (VEC_QB + hh, blk["qkv_b"][lo:hi] * scale),
                (VEC_KB + hh, blk["qkv_b"][EMBED + lo:EMBED + hi]),
                (VEC_VB + hh, blk["qkv_b"][2 * EMBED + lo:2 * EMBED + hi]),
            ]
        rows = jnp.zeros((VEC_ROWS, VEC_LANES), jnp.float32)
        for r, v in vec_entries:
            rows = rows.at[r, :v.shape[0]].set(v)
        vecs.append(rows)
        fc1_w.append(blk["fc1_w"])
        fc2_w.append(blk["fc2_w"])

    norm_gb = jnp.zeros((2, VEC_LANES), jnp.float32)
    norm_gb = norm_gb.at[0, :EMBED].set(params["norm_g"])
    norm_gb = norm_gb.at[1, :EMBED].set(params["norm_b"])

    return {
        "patch_w": params["patch_w"].astype(jnp.bfloat16),         # (CPP, D)
        "base": base,                                              # (SEQ, D) f32
        "qkv_w_heads": jnp.stack(qkv_w_heads).astype(jnp.bfloat16),   # (DEPTH*H*3, D, Dh)
        "proj_w_heads": jnp.stack(proj_w_heads).astype(jnp.bfloat16), # (DEPTH*H, Dh, D)
        "fc1_w": jnp.stack(fc1_w).astype(jnp.bfloat16),            # (DEPTH, D, MLP)
        "fc2_w": jnp.stack(fc2_w).astype(jnp.bfloat16),            # (DEPTH, MLP, D)
        "vecs": jnp.stack(vecs),                                   # (DEPTH, 16, 128) f32
        "norm_gb": norm_gb,                                        # (2, 128) f32
    }


# ---------------------------------------------------------------------------
# Forward: thin XLA glue (unfold) + ONE fused pallas_call
# ---------------------------------------------------------------------------
def dinov2_patch_tokens(packed, x):
    """x: (B, C, H, W) NCHW -> x_norm_patchtokens (B, N_PATCHES, EMBED)."""
    B = x.shape[0]
    # Unfold NCHW into per-patch rows flattened in (C, kh, kw) order to match
    # the conv weight flattening (EMBED, C, P, P) -> (C*P*P, EMBED).
    patches = x.reshape(B, IN_CH, GRID_H, PATCH, GRID_H, PATCH)
    patches = patches.transpose(0, 2, 4, 1, 3, 5).reshape(B, N_PATCHES, CPP)
    # Zero-pad (1 + NUM_REG) leading rows so one matmul + `base` reproduces
    # cls/register/pos insertion with no partial stores. bf16 MXU feed.
    patches = jnp.concatenate(
        [jnp.zeros((B, 1 + NUM_REG, CPP), patches.dtype), patches], axis=1)
    patches = patches.astype(jnp.bfloat16)

    def const_spec(shape):                 # weight blocks, fetched once (index fixed)
        rank = len(shape)
        return pl.BlockSpec(shape, lambda b, _r=rank: (0,) * _r)

    # TODO(synk): at real ViT-S/14 scale, set vmem_limit_bytes here and keep
    # all-depth weights bf16-only (or re-introduce a pipelined depth axis with
    # pl.Buffered) so the resident working set fits v7x's 64 MiB VMEM.
    out = pl.pallas_call(
        _dinov2_kernel,
        grid=(B,),
        in_specs=[
            pl.BlockSpec((1, SEQ, CPP), lambda b: (b, 0, 0)),      # patches (bf16)
            const_spec((CPP, EMBED)),                              # patch_w (bf16)
            const_spec((SEQ, EMBED)),                              # base (f32)
            const_spec((DEPTH * HEADS * 3, EMBED, HEAD_DIM)),      # per-head qkv w
            const_spec((DEPTH * HEADS, HEAD_DIM, EMBED)),          # per-head proj w
            const_spec((DEPTH, EMBED, MLP_HIDDEN)),                # fc1 w
            const_spec((DEPTH, MLP_HIDDEN, EMBED)),                # fc2 w
            const_spec((DEPTH, VEC_ROWS, VEC_LANES)),              # packed vectors
            const_spec((2, VEC_LANES)),                            # final norm g/b
        ],
        out_specs=pl.BlockSpec((1, N_PATCHES, EMBED), lambda b: (b, 0, 0)),
        out_shape=jax.ShapeDtypeStruct((B, N_PATCHES, EMBED), jnp.float32),
        scratch_shapes=[pltpu.VMEM((SEQ, EMBED), jnp.float32)],
        compiler_params=pltpu.CompilerParams(
            dimension_semantics=("parallel",)),
    )(patches, packed["patch_w"], packed["base"],
      packed["qkv_w_heads"], packed["proj_w_heads"],
      packed["fc1_w"], packed["fc2_w"],
      packed["vecs"], packed["norm_gb"])
    return out


# ---------------------------------------------------------------------------
# Pure-JAX f32 reference (torch semantics, exact erf GELU) for a tolerance check
# ---------------------------------------------------------------------------
def dinov2_reference(params, x):
    B = x.shape[0]
    patches = x.reshape(B, IN_CH, GRID_H, PATCH, GRID_H, PATCH)
    patches = patches.transpose(0, 2, 4, 1, 3, 5).reshape(B, N_PATCHES, CPP)
    tok = patches @ params["patch_w"] + params["patch_b"]
    pos = params["pos_embed"][0]

    def ln(v, g, b):
        mu = v.mean(-1, keepdims=True)
        var = ((v - mu) ** 2).mean(-1, keepdims=True)
        return (v - mu) * jax.lax.rsqrt(var + LN_EPS) * g + b

    cls = jnp.broadcast_to(params["cls_token"][0] + pos[:1], (B, 1, EMBED))
    reg = jnp.broadcast_to(params["reg_tokens"][0], (B, NUM_REG, EMBED))
    xs = jnp.concatenate([cls, reg, tok + pos[1:]], axis=1)

    def heads(t):
        return t.reshape(B, SEQ, HEADS, HEAD_DIM).transpose(0, 2, 1, 3)

    for blk in params["blocks"]:
        h = ln(xs, blk["ln1_g"], blk["ln1_b"])
        qkv = h @ blk["qkv_w"] + blk["qkv_b"]
        q, k, v = jnp.split(qkv, 3, axis=-1)
        q, k, v = heads(q) * HEAD_DIM ** -0.5, heads(k), heads(v)
        p = jax.nn.softmax(q @ k.transpose(0, 1, 3, 2), axis=-1)
        o = (p @ v).transpose(0, 2, 1, 3).reshape(B, SEQ, EMBED)
        xs = xs + (o @ blk["proj_w"] + blk["proj_b"]) * blk["ls1"]
        h2 = ln(xs, blk["ln2_g"], blk["ln2_b"])
        h2 = jax.nn.gelu(h2 @ blk["fc1_w"] + blk["fc1_b"], approximate=False)
        xs = xs + (h2 @ blk["fc2_w"] + blk["fc2_b"]) * blk["ls2"]
    return ln(xs, params["norm_g"], params["norm_b"])[:, 1 + NUM_REG:]


if __name__ == "__main__":
    key = jax.random.PRNGKey(0)
    pkey, xkey = jax.random.split(key)
    params = init_params(pkey)
    packed = pack_params(params)            # one-time prep (bf16 weights etc.)

    # small NCHW input consistent with a patch-14 ViT: (B=2, C=3, 28, 28)
    x = jax.random.normal(xkey, (2, IN_CH, IMG, IMG), jnp.float32)

    fwd = jax.jit(dinov2_patch_tokens)
    out = jax.block_until_ready(fwd(packed, x))

    assert out.shape == (2, N_PATCHES, EMBED), out.shape
    assert bool(jnp.all(jnp.isfinite(out)))

    # loose tolerance vs. f32 reference (bf16 MXU feeds, approx recip, tanh GELU)
    ref = dinov2_reference(params, x)
    max_diff = float(jnp.max(jnp.abs(out - ref)))
    assert max_diff < 0.1, f"max|diff|={max_diff}"

    print("KERNEL_OK")
</pallas_src>

<mosaic_0001>
module attributes {stable_mosaic.version = 11 : i64} {
  func.func @_dinov2_kernel(%arg0: i32, %arg1: memref<1x9x588xbf16, #tpu.memory_space<vmem>>, %arg2: memref<588x32xbf16, #tpu.memory_space<vmem>>, %arg3: memref<9x32xf32, #tpu.memory_space<vmem>>, %arg4: memref<12x32x16xbf16, #tpu.memory_space<vmem>>, %arg5: memref<4x16x32xbf16, #tpu.memory_space<vmem>>, %arg6: memref<2x32x128xbf16, #tpu.memory_space<vmem>>, %arg7: memref<2x128x32xbf16, #tpu.memory_space<vmem>>, %arg8: memref<2x16x128xf32, #tpu.memory_space<vmem>>, %arg9: memref<2x128xf32, #tpu.memory_space<vmem>>, %arg10: memref<1x4x32xf32, #tpu.memory_space<vmem>>, %arg11: memref<9x32xf32, #tpu.memory_space<vmem>>) attributes {dimension_semantics = [#tpu.dimension_semantics<parallel>], iteration_bounds = array<i64: 2>, scalar_prefetch = 0 : i64, scratch_operands = 1 : i64, tpu.core_type = #tpu.core_type<tc>, window_params = [{transform_indices = @transform_0, window_bounds = array<i64: 1, 9, 588>}, {pipeline_mode = #tpu.pipeline_mode<synchronous>, transform_indices = @transform_1, window_bounds = array<i64: 588, 32>}, {pipeline_mode = #tpu.pipeline_mode<synchronous>, transform_indices = @transform_2, window_bounds = array<i64: 9, 32>}, {pipeline_mode = #tpu.pipeline_mode<synchronous>, transform_indices = @transform_3, window_bounds = array<i64: 12, 32, 16>}, {pipeline_mode = #tpu.pipeline_mode<synchronous>, transform_indices = @transform_4, window_bounds = array<i64: 4, 16, 32>}, {pipeline_mode = #tpu.pipeline_mode<synchronous>, transform_indices = @transform_5, window_bounds = array<i64: 2, 32, 128>}, {pipeline_mode = #tpu.pipeline_mode<synchronous>, transform_indices = @transform_6, window_bounds = array<i64: 2, 128, 32>}, {pipeline_mode = #tpu.pipeline_mode<synchronous>, transform_indices = @transform_7, window_bounds = array<i64: 2, 16, 128>}, {pipeline_mode = #tpu.pipeline_mode<synchronous>, transform_indices = @transform_8, window_bounds = array<i64: 2, 128>}, {transform_indices = @transform_9, window_bounds = array<i64: 1, 4, 32>}]} {
    %c0 = arith.constant 0 : index
    %c0_0 = arith.constant 0 : index
    %c0_1 = arith.constant 0 : index
    %0 = vector.load %arg1[%c0, %c0_0, %c0_1] : memref<1x9x588xbf16, #tpu.memory_space<vmem>>, vector<1x9x588xbf16>
    %1 = vector.shape_cast %0 : vector<1x9x588xbf16> to vector<9x588xbf16>
    %c0_2 = arith.constant 0 : index
    %c0_3 = arith.constant 0 : index
    %2 = vector.load %arg2[%c0_2, %c0_3] : memref<588x32xbf16, #tpu.memory_space<vmem>>, vector<588x32xbf16>
    %cst = arith.constant dense<0.000000e+00> : vector<9x32xf32>
    %3 = tpu.matmul %1, %2, %cst {dimension_numbers = #tpu.dot_dimension_numbers<[1], [0], [0], [1], [0, 0, 1, 1], [], []>} : vector<9x588xbf16>, vector<588x32xbf16>, vector<9x32xf32> -> vector<9x32xf32>
    %c0_4 = arith.constant 0 : index
    %c0_5 = arith.constant 0 : index
    %4 = vector.load %arg3[%c0_4, %c0_5] : memref<9x32xf32, #tpu.memory_space<vmem>>, vector<9x32xf32>
    %5 = arith.addf %3, %4 : vector<9x32xf32>
    %c0_6 = arith.constant 0 : index
    %c0_7 = arith.constant 0 : index
    %6 = vector.load %arg11[%c0_6, %c0_7] : memref<9x32xf32, #tpu.memory_space<vmem>>, vector<9x32xf32>
    tpu.vector_store %arg11[%c0_6, %c0_7], %5 {strides = array<i32>} : memref<9x32xf32, #tpu.memory_space<vmem>>, vector<9x32xf32>,
    %c0_i32 = arith.constant 0 : i32
    %c2_i32 = arith.constant 2 : i32
    %7 = arith.addi %c0_i32, %c2_i32 : i32
    %c1_i32 = arith.constant 1 : i32
    scf.for %arg12 = %c0_i32 to %7 step %c1_i32  : i32 {
      %c1_i32_21 = arith.constant 1 : i32
      %36 = arith.muli %arg12, %c1_i32_21 : i32
      %c0_i32_22 = arith.constant 0 : i32
      %37 = arith.addi %c0_i32_22, %36 : i32
      %c0_23 = arith.constant 0 : index
      %c0_24 = arith.constant 0 : index
      %38 = vector.load %arg11[%c0_23, %c0_24] : memref<9x32xf32, #tpu.memory_space<vmem>>, vector<9x32xf32>
      %39 = arith.index_cast %37 : i32 to index
      %c0_25 = arith.constant 0 : index
      %c0_26 = arith.constant 0 : index
      %40 = vector.load %arg8[%39, %c0_25, %c0_26] : memref<2x16x128xf32, #tpu.memory_space<vmem>>, vector<1x1x32xf32>
      %41 = vector.shape_cast %40 : vector<1x1x32xf32> to vector<1x32xf32>
      %42 = arith.index_cast %37 : i32 to index
      %c1_27 = arith.constant 1 : index
      %c0_28 = arith.constant 0 : index
      %43 = vector.load %arg8[%42, %c1_27, %c0_28] : memref<2x16x128xf32, #tpu.memory_space<vmem>>, vector<1x1x32xf32>
      %44 = vector.shape_cast %43 : vector<1x1x32xf32> to vector<1x32xf32>
      %cst_29 = arith.constant dense<0.000000e+00> : vector<9xf32>
      %45 = vector.multi_reduction <add>, %38, %cst_29 [1] : vector<9x32xf32> to vector<9xf32>
      %46 = vector.shape_cast %45 : vector<9xf32> to vector<9x1xf32>
      %cst_30 = arith.constant 3.200000e+01 : f32
      %47 = vector.broadcast %cst_30 : f32 to vector<9x1xf32>
      %48 = arith.divf %46, %47 : vector<9x1xf32>
      %49 = vector.broadcast %48 : vector<9x1xf32> to vector<9x32xf32>
      %50 = arith.subf %38, %49 : vector<9x32xf32>
      %51 = arith.mulf %50, %50 : vector<9x32xf32>
      %cst_31 = arith.constant dense<0.000000e+00> : vector<9xf32>
      %52 = vector.multi_reduction <add>, %51, %cst_31 [1] : vector<9x32xf32> to vector<9xf32>
      %53 = vector.shape_cast %52 : vector<9xf32> to vector<9x1xf32>
      %cst_32 = arith.constant 3.200000e+01 : f32
      %54 = vector.broadcast %cst_32 : f32 to vector<9x1xf32>
      %55 = arith.divf %53, %54 : vector<9x1xf32>
      %56 = vector.broadcast %48 : vector<9x1xf32> to vector<9x32xf32>
      %57 = arith.subf %38, %56 : vector<9x32xf32>
      %cst_33 = arith.constant 9.99999997E-7 : f32
      %58 = vector.broadcast %cst_33 : f32 to vector<9x1xf32>
      %59 = arith.addf %55, %58 : vector<9x1xf32>
      %60 = math.rsqrt %59 : vector<9x1xf32>
      %61 = vector.broadcast %60 : vector<9x1xf32> to vector<9x32xf32>
      %62 = arith.mulf %57, %61 : vector<9x32xf32>
      %63 = vector.broadcast %41 : vector<1x32xf32> to vector<9x32xf32>
      %64 = arith.mulf %62, %63 : vector<9x32xf32>
      %65 = vector.broadcast %44 : vector<1x32xf32> to vector<9x32xf32>
      %66 = arith.addf %64, %65 : vector<9x32xf32>
      %67 = arith.truncf %66 : vector<9x32xf32> to vector<9x32xbf16>
      %68 = arith.index_cast %37 : i32 to index
      %c2 = arith.constant 2 : index
      %c0_34 = arith.constant 0 : index
      %69 = vector.load %arg8[%68, %c2, %c0_34] : memref<2x16x128xf32, #tpu.memory_space<vmem>>, vector<1x1x32xf32>
      %70 = vector.shape_cast %69 : vector<1x1x32xf32> to vector<1x32xf32>
      %71 = vector.shape_cast %70 : vector<1x32xf32> to vector<1x32xf32>
      %72 = vector.broadcast %71 : vector<1x32xf32> to vector<9x32xf32>
      %c2_i32_35 = arith.constant 2 : i32
      %73 = arith.muli %37, %c2_i32_35 : i32
      %c0_i32_36 = arith.constant 0 : i32
      %74 = arith.addi %73, %c0_i32_36 : i32
      %c3_i32 = arith.constant 3 : i32
      %75 = arith.muli %74, %c3_i32 : i32
      %76 = arith.index_cast %75 : i32 to index
      %c0_37 = arith.constant 0 : index
      %c0_38 = arith.constant 0 : index
      %77 = vector.load %arg4[%76, %c0_37, %c0_38] : memref<12x32x16xbf16, #tpu.memory_space<vmem>>, vector<1x32x16xbf16>
      %78 = vector.shape_cast %77 : vector<1x32x16xbf16> to vector<32x16xbf16>
      %cst_39 = arith.constant dense<0.000000e+00> : vector<9x16xf32>
      %79 = tpu.matmul %67, %78, %cst_39 {dimension_numbers = #tpu.dot_dimension_numbers<[1], [0], [0], [1], [0, 0, 1, 1], [], []>} : vector<9x32xbf16>, vector<32x16xbf16>, vector<9x16xf32> -> vector<9x16xf32>
      %80 = arith.index_cast %37 : i32 to index
      %c9 = arith.constant 9 : index
      %c0_40 = arith.constant 0 : index
      %81 = vector.load %arg8[%80, %c9, %c0_40] : memref<2x16x128xf32, #tpu.memory_space<vmem>>, vector<1x1x16xf32>
      %82 = vector.shape_cast %81 : vector<1x1x16xf32> to vector<1x16xf32>
      %83 = vector.broadcast %82 : vector<1x16xf32> to vector<9x16xf32>
      %84 = arith.addf %79, %83 : vector<9x16xf32>
      %c1_i32_41 = arith.constant 1 : i32
      %85 = arith.addi %75, %c1_i32_41 : i32
      %86 = arith.index_cast %85 : i32 to index
      %c0_42 = arith.constant 0 : index
      %c0_43 = arith.constant 0 : index
      %87 = vector.load %arg4[%86, %c0_42, %c0_43] : memref<12x32x16xbf16, #tpu.memory_space<vmem>>, vector<1x32x16xbf16>
      %88 = vector.shape_cast %87 : vector<1x32x16xbf16> to vector<32x16xbf16>
      %cst_44 = arith.constant dense<0.000000e+00> : vector<9x16xf32>
      %89 = tpu.matmul %67, %88, %cst_44 {dimension_numbers = #tpu.dot_dimension_numbers<[1], [0], [0], [1], [0, 0, 1, 1], [], []>} : vector<9x32xbf16>, vector<32x16xbf16>, vector<9x16xf32> -> vector<9x16xf32>
      %90 = arith.index_cast %37 : i32 to index
      %c11 = arith.constant 11 : index
      %c0_45 = arith.constant 0 : index
      %91 = vector.load %arg8[%90, %c11, %c0_45] : memref<2x16x128xf32, #tpu.memory_space<vmem>>, vector<1x1x16xf32>
      %92 = vector.shape_cast %91 : vector<1x1x16xf32> to vector<1x16xf32>
      %93 = vector.broadcast %92 : vector<1x16xf32> to vector<9x16xf32>
      %94 = arith.addf %89, %93 : vector<9x16xf32>
      %c2_i32_46 = arith.constant 2 : i32
      %95 = arith.addi %75, %c2_i32_46 : i32
      %96 = arith.index_cast %95 : i32 to index
      %c0_47 = arith.constant 0 : index
      %c0_48 = arith.constant 0 : index
      %97 = vector.load %arg4[%96, %c0_47, %c0_48] : memref<12x32x16xbf16, #tpu.memory_space<vmem>>, vector<1x32x16xbf16>
      %98 = vector.shape_cast %97 : vector<1x32x16xbf16> to vector<32x16xbf16>
      %cst_49 = arith.constant dense<0.000000e+00> : vector<9x16xf32>
      %99 = tpu.matmul %67, %98, %cst_49 {dimension_numbers = #tpu.dot_dimension_numbers<[1], [0], [0], [1], [0, 0, 1, 1], [], []>} : vector<9x32xbf16>, vector<32x16xbf16>, vector<9x16xf32> -> vector<9x16xf32>
      %100 = arith.index_cast %37 : i32 to index
      %c13 = arith.constant 13 : index
      %c0_50 = arith.constant 0 : index
      %101 = vector.load %arg8[%100, %c13, %c0_50] : memref<2x16x128xf32, #tpu.memory_space<vmem>>, vector<1x1x16xf32>
      %102 = vector.shape_cast %101 : vector<1x1x16xf32> to vector<1x16xf32>
      %103 = vector.broadcast %102 : vector<1x16xf32> to vector<9x16xf32>
      %104 = arith.addf %99, %103 : vector<9x16xf32>
      %cst_51 = arith.constant dense<0.000000e+00> : vector<9x9xf32>
      %105 = tpu.matmul %84, %94, %cst_51 {dimension_numbers = #tpu.dot_dimension_numbers<[1], [1], [0], [0], [0, 0, 1, 0], [], []>} : vector<9x16xf32>, vector<9x16xf32>, vector<9x9xf32> -> vector<9x9xf32>
      %cst_52 = arith.constant dense<0xFF800000> : vector<9xf32>
      %106 = vector.multi_reduction <maximumf>, %105, %cst_52 [1] : vector<9x9xf32> to vector<9xf32>
      %107 = vector.shape_cast %106 : vector<9xf32> to vector<9x1xf32>
      %108 = vector.broadcast %107 : vector<9x1xf32> to vector<9x9xf32>
      %109 = arith.subf %105, %108 : vector<9x9xf32>
      %110 = math.exp %109 : vector<9x9xf32>
      %cst_53 = arith.constant dense<0.000000e+00> : vector<9xf32>
      %111 = vector.multi_reduction <add>, %110, %cst_53 [1] : vector<9x9xf32> to vector<9xf32>
      %112 = vector.shape_cast %111 : vector<9xf32> to vector<9x1xf32>
      %113 = tpu.reciprocal %112 {approx = true} : vector<9x1xf32> -> vector<9x1xf32>
      %114 = vector.broadcast %113 : vector<9x1xf32> to vector<9x9xf32>
      %115 = arith.mulf %110, %114 : vector<9x9xf32>
      %cst_54 = arith.constant dense<0.000000e+00> : vector<9x16xf32>
      %116 = tpu.matmul %115, %104, %cst_54 {dimension_numbers = #tpu.dot_dimension_numbers<[1], [0], [0], [1], [0, 0, 1, 1], [], []>} : vector<9x9xf32>, vector<9x16xf32>, vector<9x16xf32> -> vector<9x16xf32>
      %117 = arith.truncf %116 : vector<9x16xf32> to vector<9x16xbf16>
      %c2_i32_55 = arith.constant 2 : i32
      %118 = arith.muli %37, %c2_i32_55 : i32
      %c0_i32_56 = arith.constant 0 : i32
      %119 = arith.addi %118, %c0_i32_56 : i32
      %120 = arith.index_cast %119 : i32 to index
      %c0_57 = arith.constant 0 : index
      %c0_58 = arith.constant 0 : index
      %121 = vector.load %arg5[%120, %c0_57, %c0_58] : memref<4x16x32xbf16, #tpu.memory_space<vmem>>, vector<1x16x32xbf16>
      %122 = vector.shape_cast %121 : vector<1x16x32xbf16> to vector<16x32xbf16>
      %cst_59 = arith.constant dense<0.000000e+00> : vector<9x32xf32>
      %123 = tpu.matmul %117, %122, %cst_59 {dimension_numbers = #tpu.dot_dimension_numbers<[1], [0], [0], [1], [0, 0, 1, 1], [], []>} : vector<9x16xbf16>, vector<16x32xbf16>, vector<9x32xf32> -> vector<9x32xf32>
      %124 = arith.addf %72, %123 : vector<9x32xf32>
      %c2_i32_60 = arith.constant 2 : i32
      %125 = arith.muli %37, %c2_i32_60 : i32
      %c1_i32_61 = arith.constant 1 : i32
      %126 = arith.addi %125, %c1_i32_61 : i32
      %c3_i32_62 = arith.constant 3 : i32
      %127 = arith.muli %126, %c3_i32_62 : i32
      %128 = arith.index_cast %127 : i32 to index
      %c0_63 = arith.constant 0 : index
      %c0_64 = arith.constant 0 : index
      %129 = vector.load %arg4[%128, %c0_63, %c0_64] : memref<12x32x16xbf16, #tpu.memory_space<vmem>>, vector<1x32x16xbf16>
      %130 = vector.shape_cast %129 : vector<1x32x16xbf16> to vector<32x16xbf16>
      %cst_65 = arith.constant dense<0.000000e+00> : vector<9x16xf32>
      %131 = tpu.matmul %67, %130, %cst_65 {dimension_numbers = #tpu.dot_dimension_numbers<[1], [0], [0], [1], [0, 0, 1, 1], [], []>} : vector<9x32xbf16>, vector<32x16xbf16>, vector<9x16xf32> -> vector<9x16xf32>
      %132 = arith.index_cast %37 : i32 to index
      %c10 = arith.constant 10 : index
      %c0_66 = arith.constant 0 : index
      %133 = vector.load %arg8[%132, %c10, %c0_66] : memref<2x16x128xf32, #tpu.memory_space<vmem>>, vector<1x1x16xf32>
      %134 = vector.shape_cast %133 : vector<1x1x16xf32> to vector<1x16xf32>
      %135 = vector.broadcast %134 : vector<1x16xf32> to vector<9x16xf32>
      %136 = arith.addf %131, %135 : vector<9x16xf32>
      %c1_i32_67 = arith.constant 1 : i32
      %137 = arith.addi %127, %c1_i32_67 : i32
      %138 = arith.index_cast %137 : i32 to index
      %c0_68 = arith.constant 0 : index
      %c0_69 = arith.constant 0 : index
      %139 = vector.load %arg4[%138, %c0_68, %c0_69] : memref<12x32x16xbf16, #tpu.memory_space<vmem>>, vector<1x32x16xbf16>
      %140 = vector.shape_cast %139 : vector<1x32x16xbf16> to vector<32x16xbf16>
      %cst_70 = arith.constant dense<0.000000e+00> : vector<9x16xf32>
      %141 = tpu.matmul %67, %140, %cst_70 {dimension_numbers = #tpu.dot_dimension_numbers<[1], [0], [0], [1], [0, 0, 1, 1], [], []>} : vector<9x32xbf16>, vector<32x16xbf16>, vector<9x16xf32> -> vector<9x16xf32>
      %142 = arith.index_cast %37 : i32 to index
      %c12 = arith.constant 12 : index
      %c0_71 = arith.constant 0 : index
      %143 = vector.load %arg8[%142, %c12, %c0_71] : memref<2x16x128xf32, #tpu.memory_space<vmem>>, vector<1x1x16xf32>
      %144 = vector.shape_cast %143 : vector<1x1x16xf32> to vector<1x16xf32>
      %145 = vector.broadcast %144 : vector<1x16xf32> to vector<9x16xf32>
      %146 = arith.addf %141, %145 : vector<9x16xf32>
      %c2_i32_72 = arith.constant 2 : i32
      %147 = arith.addi %127, %c2_i32_72 : i32
      %148 = arith.index_cast %147 : i32 to index
      %c0_73 = arith.constant 0 : index
      %c0_74 = arith.constant 0 : index
      %149 = vector.load %arg4[%148, %c0_73, %c0_74] : memref<12x32x16xbf16, #tpu.memory_space<vmem>>, vector<1x32x16xbf16>
      %150 = vector.shape_cast %149 : vector<1x32x16xbf16> to vector<32x16xbf16>
      %cst_75 = arith.constant dense<0.000000e+00> : vector<9x16xf32>
      %151 = tpu.matmul %67, %150, %cst_75 {dimension_numbers = #tpu.dot_dimension_numbers<[1], [0], [0], [1], [0, 0, 1, 1], [], []>} : vector<9x32xbf16>, vector<32x16xbf16>, vector<9x16xf32> -> vector<9x16xf32>
      %152 = arith.index_cast %37 : i32 to index
      %c14 = arith.constant 14 : index
      %c0_76 = arith.constant 0 : index
      %153 = vector.load %arg8[%152, %c14, %c0_76] : memref<2x16x128xf32, #tpu.memory_space<vmem>>, vector<1x1x16xf32>
      %154 = vector.shape_cast %153 : vector<1x1x16xf32> to vector<1x16xf32>
      %155 = vector.broadcast %154 : vector<1x16xf32> to vector<9x16xf32>
      %156 = arith.addf %151, %155 : vector<9x16xf32>
      %cst_77 = arith.constant dense<0.000000e+00> : vector<9x9xf32>
      %157 = tpu.matmul %136, %146, %cst_77 {dimension_numbers = #tpu.dot_dimension_numbers<[1], [1], [0], [0], [0, 0, 1, 0], [], []>} : vector<9x16xf32>, vector<9x16xf32>, vector<9x9xf32> -> vector<9x9xf32>
      %cst_78 = arith.constant dense<0xFF800000> : vector<9xf32>
      %158 = vector.multi_reduction <maximumf>, %157, %cst_78 [1] : vector<9x9xf32> to vector<9xf32>
      %159 = vector.shape_cast %158 : vector<9xf32> to vector<9x1xf32>
      %160 = vector.broadcast %159 : vector<9x1xf32> to vector<9x9xf32>
      %161 = arith.subf %157, %160 : vector<9x9xf32>
      %162 = math.exp %161 : vector<9x9xf32>
      %cst_79 = arith.constant dense<0.000000e+00> : vector<9xf32>
      %163 = vector.multi_reduction <add>, %162, %cst_79 [1] : vector<9x9xf32> to vector<9xf32>
      %164 = vector.shape_cast %163 : vector<9xf32> to vector<9x1xf32>
      %165 = tpu.reciprocal %164 {approx = true} : vector<9x1xf32> -> vector<9x1xf32>
      %166 = vector.broadcast %165 : vector<9x1xf32> to vector<9x9xf32>
      %167 = arith.mulf %162, %166 : vector<9x9xf32>
      %cst_80 = arith.constant dense<0.000000e+00> : vector<9x16xf32>
      %168 = tpu.matmul %167, %156, %cst_80 {dimension_numbers = #tpu.dot_dimension_numbers<[1], [0], [0], [1], [0, 0, 1, 1], [], []>} : vector<9x9xf32>, vector<9x16xf32>, vector<9x16xf32> -> vector<9x16xf32>
      %169 = arith.truncf %168 : vector<9x16xf32> to vector<9x16xbf16>
      %c2_i32_81 = arith.constant 2 : i32
      %170 = arith.muli %37, %c2_i32_81 : i32
      %c1_i32_82 = arith.constant 1 : i32
      %171 = arith.addi %170, %c1_i32_82 : i32
      %172 = arith.index_cast %171 : i32 to index
      %c0_83 = arith.constant 0 : index
      %c0_84 = arith.constant 0 : index
      %173 = vector.load %arg5[%172, %c0_83, %c0_84] : memref<4x16x32xbf16, #tpu.memory_space<vmem>>, vector<1x16x32xbf16>
      %174 = vector.shape_cast %173 : vector<1x16x32xbf16> to vector<16x32xbf16>
      %cst_85 = arith.constant dense<0.000000e+00> : vector<9x32xf32>
      %175 = tpu.matmul %169, %174, %cst_85 {dimension_numbers = #tpu.dot_dimension_numbers<[1], [0], [0], [1], [0, 0, 1, 1], [], []>} : vector<9x16xbf16>, vector<16x32xbf16>, vector<9x32xf32> -> vector<9x32xf32>
      %176 = arith.addf %124, %175 : vector<9x32xf32>
      %177 = arith.index_cast %37 : i32 to index
      %c3 = arith.constant 3 : index
      %c0_86 = arith.constant 0 : index
      %178 = vector.load %arg8[%177, %c3, %c0_86] : memref<2x16x128xf32, #tpu.memory_space<vmem>>, vector<1x1x32xf32>
      %179 = vector.shape_cast %178 : vector<1x1x32xf32> to vector<1x32xf32>
      %180 = vector.broadcast %179 : vector<1x32xf32> to vector<9x32xf32>
      %181 = arith.mulf %176, %180 : vector<9x32xf32>
      %182 = arith.addf %38, %181 : vector<9x32xf32>
      %183 = arith.index_cast %37 : i32 to index
      %c4 = arith.constant 4 : index
      %c0_87 = arith.constant 0 : index
      %184 = vector.load %arg8[%183, %c4, %c0_87] : memref<2x16x128xf32, #tpu.memory_space<vmem>>, vector<1x1x32xf32>
      %185 = vector.shape_cast %184 : vector<1x1x32xf32> to vector<1x32xf32>
      %186 = arith.index_cast %37 : i32 to index
      %c5_88 = arith.constant 5 : index
      %c0_89 = arith.constant 0 : index
      %187 = vector.load %arg8[%186, %c5_88, %c0_89] : memref<2x16x128xf32, #tpu.memory_space<vmem>>, vector<1x1x32xf32>
      %188 = vector.shape_cast %187 : vector<1x1x32xf32> to vector<1x32xf32>
      %cst_90 = arith.constant dense<0.000000e+00> : vector<9xf32>
      %189 = vector.multi_reduction <add>, %182, %cst_90 [1] : vector<9x32xf32> to vector<9xf32>
      %190 = vector.shape_cast %189 : vector<9xf32> to vector<9x1xf32>
      %cst_91 = arith.constant 3.200000e+01 : f32
      %191 = vector.broadcast %cst_91 : f32 to vector<9x1xf32>
      %192 = arith.divf %190, %191 : vector<9x1xf32>
      %193 = vector.broadcast %192 : vector<9x1xf32> to vector<9x32xf32>
      %194 = arith.subf %182, %193 : vector<9x32xf32>
      %195 = arith.mulf %194, %194 : vector<9x32xf32>
      %cst_92 = arith.constant dense<0.000000e+00> : vector<9xf32>
      %196 = vector.multi_reduction <add>, %195, %cst_92 [1] : vector<9x32xf32> to vector<9xf32>
      %197 = vector.shape_cast %196 : vector<9xf32> to vector<9x1xf32>
      %cst_93 = arith.constant 3.200000e+01 : f32
      %198 = vector.broadcast %cst_93 : f32 to vector<9x1xf32>
      %199 = arith.divf %197, %198 : vector<9x1xf32>
      %200 = vector.broadcast %192 : vector<9x1xf32> to vector<9x32xf32>
      %201 = arith.subf %182, %200 : vector<9x32xf32>
      %cst_94 = arith.constant 9.99999997E-7 : f32
      %202 = vector.broadcast %cst_94 : f32 to vector<9x1xf32>
      %203 = arith.addf %199, %202 : vector<9x1xf32>
      %204 = math.rsqrt %203 : vector<9x1xf32>
      %205 = vector.broadcast %204 : vector<9x1xf32> to vector<9x32xf32>
      %206 = arith.mulf %201, %205 : vector<9x32xf32>
      %207 = vector.broadcast %185 : vector<1x32xf32> to vector<9x32xf32>
      %208 = arith.mulf %206, %207 : vector<9x32xf32>
      %209 = vector.broadcast %188 : vector<1x32xf32> to vector<9x32xf32>
      %210 = arith.addf %208, %209 : vector<9x32xf32>
      %211 = arith.truncf %210 : vector<9x32xf32> to vector<9x32xbf16>
      %212 = arith.index_cast %37 : i32 to index
      %c0_95 = arith.constant 0 : index
      %c0_96 = arith.constant 0 : index
      %213 = vector.load %arg6[%212, %c0_95, %c0_96] : memref<2x32x128xbf16, #tpu.memory_space<vmem>>, vector<1x32x128xbf16>
      %214 = vector.shape_cast %213 : vector<1x32x128xbf16> to vector<32x128xbf16>
      %cst_97 = arith.constant dense<0.000000e+00> : vector<9x128xf32>
      %215 = tpu.matmul %211, %214, %cst_97 {dimension_numbers = #tpu.dot_dimension_numbers<[1], [0], [0], [1], [0, 0, 1, 1], [], []>} : vector<9x32xbf16>, vector<32x128xbf16>, vector<9x128xf32> -> vector<9x128xf32>
      %216 = arith.index_cast %37 : i32 to index
      %c8 = arith.constant 8 : index
      %c0_98 = arith.constant 0 : index
      %217 = vector.load %arg8[%216, %c8, %c0_98] : memref<2x16x128xf32, #tpu.memory_space<vmem>>, vector<1x1x128xf32>
      %218 = vector.shape_cast %217 : vector<1x1x128xf32> to vector<1x128xf32>
      %219 = vector.broadcast %218 : vector<1x128xf32> to vector<9x128xf32>
      %220 = arith.addf %215, %219 : vector<9x128xf32>
      %221 = arith.mulf %220, %220 : vector<9x128xf32>
      %222 = arith.mulf %220, %221 : vector<9x128xf32>
      %cst_99 = arith.constant 4.471500e-02 : f32
      %223 = vector.broadcast %cst_99 : f32 to vector<9x128xf32>
      %224 = arith.mulf %223, %222 : vector<9x128xf32>
      %225 = arith.addf %220, %224 : vector<9x128xf32>
      %cst_100 = arith.constant 0.797884583 : f32
      %226 = vector.broadcast %cst_100 : f32 to vector<9x128xf32>
      %227 = arith.mulf %226, %225 : vector<9x128xf32>
      %228 = math.tanh %227 : vector<9x128xf32>
      %cst_101 = arith.constant 1.000000e+00 : f32
      %229 = vector.broadcast %cst_101 : f32 to vector<9x128xf32>
      %230 = arith.addf %229, %228 : vector<9x128xf32>
      %cst_102 = arith.constant 5.000000e-01 : f32
      %231 = vector.broadcast %cst_102 : f32 to vector<9x128xf32>
      %232 = arith.mulf %231, %230 : vector<9x128xf32>
      %233 = arith.mulf %220, %232 : vector<9x128xf32>
      %234 = arith.truncf %233 : vector<9x128xf32> to vector<9x128xbf16>
      %235 = arith.index_cast %37 : i32 to index
      %c0_103 = arith.constant 0 : index
      %c0_104 = arith.constant 0 : index
      %236 = vector.load %arg7[%235, %c0_103, %c0_104] : memref<2x128x32xbf16, #tpu.memory_space<vmem>>, vector<1x128x32xbf16>
      %237 = vector.shape_cast %236 : vector<1x128x32xbf16> to vector<128x32xbf16>
      %cst_105 = arith.constant dense<0.000000e+00> : vector<9x32xf32>
      %238 = tpu.matmul %234, %237, %cst_105 {dimension_numbers = #tpu.dot_dimension_numbers<[1], [0], [0], [1], [0, 0, 1, 1], [], []>} : vector<9x128xbf16>, vector<128x32xbf16>, vector<9x32xf32> -> vector<9x32xf32>
      %239 = arith.index_cast %37 : i32 to index
      %c6 = arith.constant 6 : index
      %c0_106 = arith.constant 0 : index
      %240 = vector.load %arg8[%239, %c6, %c0_106] : memref<2x16x128xf32, #tpu.memory_space<vmem>>, vector<1x1x32xf32>
      %241 = vector.shape_cast %240 : vector<1x1x32xf32> to vector<1x32xf32>
      %242 = vector.broadcast %241 : vector<1x32xf32> to vector<9x32xf32>
      %243 = arith.addf %238, %242 : vector<9x32xf32>
      %244 = arith.index_cast %37 : i32 to index
      %c7 = arith.constant 7 : index
      %c0_107 = arith.constant 0 : index
      %245 = vector.load %arg8[%244, %c7, %c0_107] : memref<2x16x128xf32, #tpu.memory_space<vmem>>, vector<1x1x32xf32>
      %246 = vector.shape_cast %245 : vector<1x1x32xf32> to vector<1x32xf32>
      %247 = vector.broadcast %246 : vector<1x32xf32> to vector<9x32xf32>
      %248 = arith.mulf %243, %247 : vector<9x32xf32>
      %249 = arith.addf %182, %248 : vector<9x32xf32>
      %c0_108 = arith.constant 0 : index
      %c0_109 = arith.constant 0 : index
      %250 = vector.load %arg11[%c0_108, %c0_109] : memref<9x32xf32, #tpu.memory_space<vmem>>, vector<9x32xf32>
      tpu.vector_store %arg11[%c0_108, %c0_109], %249 {strides = array<i32>} : memref<9x32xf32, #tpu.memory_space<vmem>>, vector<9x32xf32>,
    }
    %c2_i32_8 = arith.constant 2 : i32
    %c5 = arith.constant 5 : index
    %c0_9 = arith.constant 0 : index
    %8 = vector.load %arg11[%c5, %c0_9] : memref<9x32xf32, #tpu.memory_space<vmem>>, vector<4x32xf32>
    %c0_10 = arith.constant 0 : index
    %c0_11 = arith.constant 0 : index
    %9 = vector.load %arg9[%c0_10, %c0_11] : memref<2x128xf32, #tpu.memory_space<vmem>>, vector<1x32xf32>
    %c1 = arith.constant 1 : index
    %c0_12 = arith.constant 0 : index
    %10 = vector.load %arg9[%c1, %c0_12] : memref<2x128xf32, #tpu.memory_space<vmem>>, vector<1x32xf32>
    %cst_13 = arith.constant dense<0.000000e+00> : vector<4xf32>
    %11 = vector.multi_reduction <add>, %8, %cst_13 [1] : vector<4x32xf32> to vector<4xf32>
    %12 = vector.shape_cast %11 : vector<4xf32> to vector<4x1xf32>
    %cst_14 = arith.constant 3.200000e+01 : f32
    %13 = vector.broadcast %cst_14 : f32 to vector<4x1xf32>
    %14 = arith.divf %12, %13 : vector<4x1xf32>
    %15 = vector.broadcast %14 : vector<4x1xf32> to vector<4x32xf32>
    %16 = arith.subf %8, %15 : vector<4x32xf32>
    %17 = arith.mulf %16, %16 : vector<4x32xf32>
    %cst_15 = arith.constant dense<0.000000e+00> : vector<4xf32>
    %18 = vector.multi_reduction <add>, %17, %cst_15 [1] : vector<4x32xf32> to vector<4xf32>
    %19 = vector.shape_cast %18 : vector<4xf32> to vector<4x1xf32>
    %cst_16 = arith.constant 3.200000e+01 : f32
    %20 = vector.broadcast %cst_16 : f32 to vector<4x1xf32>
    %21 = arith.divf %19, %20 : vector<4x1xf32>
    %22 = vector.broadcast %14 : vector<4x1xf32> to vector<4x32xf32>
    %23 = arith.subf %8, %22 : vector<4x32xf32>
    %cst_17 = arith.constant 9.99999997E-7 : f32
    %24 = vector.broadcast %cst_17 : f32 to vector<4x1xf32>
    %25 = arith.addf %21, %24 : vector<4x1xf32>
    %26 = math.rsqrt %25 : vector<4x1xf32>
    %27 = vector.broadcast %26 : vector<4x1xf32> to vector<4x32xf32>
    %28 = arith.mulf %23, %27 : vector<4x32xf32>
    %29 = vector.broadcast %9 : vector<1x32xf32> to vector<4x32xf32>
    %30 = arith.mulf %28, %29 : vector<4x32xf32>
    %31 = vector.broadcast %10 : vector<1x32xf32> to vector<4x32xf32>
    %32 = arith.addf %30, %31 : vector<4x32xf32>
    %c0_18 = arith.constant 0 : index
    %c0_19 = arith.constant 0 : index
    %c0_20 = arith.constant 0 : index
    %33 = vector.load %arg10[%c0_18, %c0_19, %c0_20] : memref<1x4x32xf32, #tpu.memory_space<vmem>>, vector<1x4x32xf32>
    %34 = vector.shape_cast %33 : vector<1x4x32xf32> to vector<4x32xf32>
    %35 = vector.shape_cast %32 : vector<4x32xf32> to vector<1x4x32xf32>
    tpu.vector_store %arg10[%c0_18, %c0_19, %c0_20], %35 {strides = array<i32>} : memref<1x4x32xf32, #tpu.memory_space<vmem>>, vector<1x4x32xf32>,
    return
  }
  func.func @transform_0(%arg0: i32) -> (i32, i32, i32) {
    %c0_i32 = arith.constant 0 : i32
    %c0_i32_0 = arith.constant 0 : i32
    %c0_i32_1 = arith.constant 0 : i32
    return %arg0, %c0_i32, %c0_i32_0 : i32, i32, i32
  }
  func.func @transform_1(%arg0: i32) -> (i32, i32) {
    %c0_i32 = arith.constant 0 : i32
    %c0_i32_0 = arith.constant 0 : i32
    %c0_i32_1 = arith.constant 0 : i32
    return %c0_i32, %c0_i32_0 : i32, i32
  }
  func.func @transform_2(%arg0: i32) -> (i32, i32) {
    %c0_i32 = arith.constant 0 : i32
    %c0_i32_0 = arith.constant 0 : i32
    %c0_i32_1 = arith.constant 0 : i32
    return %c0_i32, %c0_i32_0 : i32, i32
  }
  func.func @transform_3(%arg0: i32) -> (i32, i32, i32) {
    %c0_i32 = arith.constant 0 : i32
    %c0_i32_0 = arith.constant 0 : i32
    %c0_i32_1 = arith.constant 0 : i32
    %c0_i32_2 = arith.constant 0 : i32
    return %c0_i32, %c0_i32_0, %c0_i32_1 : i32, i32, i32
  }
  func.func @transform_4(%arg0: i32) -> (i32, i32, i32) {
    %c0_i32 = arith.constant 0 : i32
    %c0_i32_0 = arith.constant 0 : i32
    %c0_i32_1 = arith.constant 0 : i32
    %c0_i32_2 = arith.constant 0 : i32
    return %c0_i32, %c0_i32_0, %c0_i32_1 : i32, i32, i32
  }
  func.func @transform_5(%arg0: i32) -> (i32, i32, i32) {
    %c0_i32 = arith.constant 0 : i32
    %c0_i32_0 = arith.constant 0 : i32
    %c0_i32_1 = arith.constant 0 : i32
    %c0_i32_2 = arith.constant 0 : i32
    return %c0_i32, %c0_i32_0, %c0_i32_1 : i32, i32, i32
  }
  func.func @transform_6(%arg0: i32) -> (i32, i32, i32) {
    %c0_i32 = arith.constant 0 : i32
    %c0_i32_0 = arith.constant 0 : i32
    %c0_i32_1 = arith.constant 0 : i32
    %c0_i32_2 = arith.constant 0 : i32
    return %c0_i32, %c0_i32_0, %c0_i32_1 : i32, i32, i32
  }
  func.func @transform_7(%arg0: i32) -> (i32, i32, i32) {
    %c0_i32 = arith.constant 0 : i32
    %c0_i32_0 = arith.constant 0 : i32
    %c0_i32_1 = arith.constant 0 : i32
    %c0_i32_2 = arith.constant 0 : i32
    return %c0_i32, %c0_i32_0, %c0_i32_1 : i32, i32, i32
  }
  func.func @transform_8(%arg0: i32) -> (i32, i32) {
    %c0_i32 = arith.constant 0 : i32
    %c0_i32_0 = arith.constant 0 : i32
    %c0_i32_1 = arith.constant 0 : i32
    return %c0_i32, %c0_i32_0 : i32, i32
  }
  func.func @transform_9(%arg0: i32) -> (i32, i32, i32) {
    %c0_i32 = arith.constant 0 : i32
    %c0_i32_0 = arith.constant 0 : i32
    %c0_i32_1 = arith.constant 0 : i32
    return %arg0, %c0_i32, %c0_i32_0 : i32, i32, i32
  }
}

</mosaic_0001>

<llo_original>
// kernel: dinov2_patch_tokens.1
$region0: #{dinov2_patch_tokens.1}
  #allocation0 [shape = 'u32[]', space=smem, size = 0x4, offset = 0x4, fixed_abs, tag = 'smem constant byte address 0x4 - core index']
  #allocation1 [shape = 'u32[144,128]{1,0:T(1,128)}', space=vmem, size = 0x12000, scoped, tag = 'internal scratch']
  #allocation2 [shape = 'f32[9,32]{1,0:T(8,128)}', space=vmem, size = 0x2000, scoped, tag = 'scratch operand']
  %s0 = inlined_call_operand.vmem [shape: bf16[2,9,588], index: 0, kind: input, shape index: {}]
  %s1 = inlined_call_operand.vmem [shape: bf16[588,32], index: 1, kind: input, shape index: {}]
  %s2 = inlined_call_operand.vmem [shape: f32[9,32], index: 2, kind: input, shape index: {}]
  %s3 = inlined_call_operand.vmem [shape: bf16[12,32,16], index: 3, kind: input, shape index: {}]
  %s4 = inlined_call_operand.vmem [shape: bf16[4,16,32], index: 4, kind: input, shape index: {}]
  %s5 = inlined_call_operand.vmem [shape: bf16[2,32,128], index: 5, kind: input, shape index: {}]
  %s6 = inlined_call_operand.vmem [shape: bf16[2,128,32], index: 6, kind: input, shape index: {}]
  %s7 = inlined_call_operand.vmem [shape: f32[2,16,128], index: 7, kind: input, shape index: {}]
  %s8 = inlined_call_operand.vmem [shape: f32[2,128], index: 8, kind: input, shape index: {}]
  %s9 = inlined_call_operand.hbm [shape: f32[2,4,32], index: 9, kind: output, shape index: {}]
  %s10 = sld [smem:[#allocation0]]
  $region76: #{dinov2_patch_tokens.1} parent=0
    _
  %s12 = ssub.s32 1, %s10
  %s13 = scalar_select 0, %s12, %s10
  $region1: #{dinov2_patch_tokens.1} parent=0
    #allocation3 [shape = 'u8[4096]{0}', space=vmem, size = 0x1000, scoped, tag = 'output window, operand 0']
    #allocation4 [shape = 's32[2]{0}', space=sflag, size = 0x8, scoped, tag = 'scoped memory for dinov2_patch_tokens.1']
    %14 = vsyncpa [#allocation4], 0
    %s15 = scalar_lea.sflag [#allocation4], 1
    %16 = vsyncpa %s15, 0
    loop: start=0, step=1, limit=4
    $region2: #{dinov2_patch_tokens.1} parent=1 // loop_pre_header
      _
    $region3: #{dinov2_patch_tokens.1} parent=1 // loop_header
      %s18 = sphi 0, %s22
      %p19 = scmp.ge.s32.totalorder %s18, 4
      %s28 = sphi 0, %s30
      %s31 = sphi 0, %s28
      %s32 = sphi 0, %s31
      %s48 = sphi 0, %s32
      %s52 = sphi 0, %s52
      %s54 = sphi 0, %s52
      %s55 = sphi 0, %s54
      %s69 = sphi 0, %s55
      %s73 = sphi 0, %s73
      %s75 = sphi 0, %s73
      %s76 = sphi 0, %s75
      %s90 = sphi 0, %s76
      %s94 = sphi 0, %s94
      %s96 = sphi 0, %s94
      %s97 = sphi 0, %s96
      %s111 = sphi 0, %s97
      %s115 = sphi 0, %s115
      %s117 = sphi 0, %s115
      %s118 = sphi 0, %s117
      %s132 = sphi 0, %s118
      %s136 = sphi 0, %s136
      %s138 = sphi 0, %s136
      %s139 = sphi 0, %s138
      %s153 = sphi 0, %s139
      %s157 = sphi 0, %s157
      %s159 = sphi 0, %s157
      %s160 = sphi 0, %s159
      %s174 = sphi 0, %s160
      %s178 = sphi 0, %s178
      %s180 = sphi 0, %s178
      %s181 = sphi 0, %s180
      %s195 = sphi 0, %s181
      %s199 = sphi 0, %s199
      %s201 = sphi 0, %s199
      %s202 = sphi 0, %s201
      %s216 = sphi 0, %s202
      %s222 = sphi 0, %s224
      %s225 = sphi 0, %s222
      %s226 = sphi 0, %s225
      %s242 = sphi 0, %s226
    $region4: #{dinov2_patch_tokens.1} parent=1 // loop_header_branch
      %21 = sbr.rel (%p19) target = $region8
    $region5: #{dinov2_patch_tokens.1} parent=1 // loop_body
      %s23 = ssub.s32 %s18, 1
      %s24 = ssub.s32 %s18, 2
      %s25 = sadd.s32 %s18, 1
      %s26 = ssub.s32 %s18, %s25
      %p27 = scmp.eq.s32.totalorder %s26, 0
      %s29 = sadd.s32 %s28, 1
      %s30 = scalar_select %p27, %s28, %s29
      %p33 = pneg %p27
      %p34 = scmp.eq.s32.totalorder %s18, 1
      %p35 = por %p33, %p34
      %p36 = scmp.ne.s32.totalorder %s28, %s31
      %p37 = scmp.eq.s32.totalorder %s18, 0
      %p38 = por %p36, %p37
      %p39 = scmp.ne.s32.totalorder %s28, %s31
      %p40 = scmp.eq.s32.totalorder %s23, 1
      %p41 = por %p39, %p40
      %p42 = scmp.ne.s32.totalorder %s31, %s32
      %p43 = scmp.eq.s32.totalorder %s23, 0
      %p44 = por %p42, %p43
      %p45 = scmp.ne.s32.totalorder %s31, %s32
      %p46 = scmp.eq.s32.totalorder %s24, 1
      %p47 = por %p45, %p46
      %p49 = scmp.ne.s32.totalorder %s32, %s48
      %p50 = scmp.eq.s32.totalorder %s24, 0
      %p51 = por %p49, %p50
      %s53 = sadd.s32 %s52, 1
      %p56 = scmp.eq.s32.totalorder %s18, 1
      %p57 = scmp.ne.s32.totalorder %s52, %s54
      %p58 = scmp.eq.s32.totalorder %s18, 0
      %p59 = por %p57, %p58
      %p60 = scmp.ne.s32.totalorder %s52, %s54
      %p61 = scmp.eq.s32.totalorder %s23, 1
      %p62 = por %p60, %p61
      %p63 = scmp.ne.s32.totalorder %s54, %s55
      %p64 = scmp.eq.s32.totalorder %s23, 0
      %p65 = por %p63, %p64
      %p66 = scmp.ne.s32.totalorder %s54, %s55
      %p67 = scmp.eq.s32.totalorder %s24, 1
      %p68 = por %p66, %p67
      %p70 = scmp.ne.s32.totalorder %s55, %s69
      %p71 = scmp.eq.s32.totalorder %s24, 0
      %p72 = por %p70, %p71
      %s74 = sadd.s32 %s73, 1
      %p77 = scmp.eq.s32.totalorder %s18, 1
      %p78 = scmp.ne.s32.totalorder %s73, %s75
      %p79 = scmp.eq.s32.totalorder %s18, 0
      %p80 = por %p78, %p79
      %p81 = scmp.ne.s32.totalorder %s73, %s75
      %p82 = scmp.eq.s32.totalorder %s23, 1
      %p83 = por %p81, %p82
      %p84 = scmp.ne.s32.totalorder %s75, %s76
      %p85 = scmp.eq.s32.totalorder %s23, 0
      %p86 = por %p84, %p85
      %p87 = scmp.ne.s32.totalorder %s75, %s76
      %p88 = scmp.eq.s32.totalorder %s24, 1
      %p89 = por %p87, %p88
      %p91 = scmp.ne.s32.totalorder %s76, %s90
      %p92 = scmp.eq.s32.totalorder %s24, 0
      %p93 = por %p91, %p92
      %s95 = sadd.s32 %s94, 1
      %p98 = scmp.eq.s32.totalorder %s18, 1
      %p99 = scmp.ne.s32.totalorder %s94, %s96
      %p100 = scmp.eq.s32.totalorder %s18, 0
      %p101 = por %p99, %p100
      %p102 = scmp.ne.s32.totalorder %s94, %s96
      %p103 = scmp.eq.s32.totalorder %s23, 1
      %p104 = por %p102, %p103
      %p105 = scmp.ne.s32.totalorder %s96, %s97
      %p106 = scmp.eq.s32.totalorder %s23, 0
      %p107 = por %p105, %p106
      %p108 = scmp.ne.s32.totalorder %s96, %s97
      %p109 = scmp.eq.s32.totalorder %s24, 1
      %p110 = por %p108, %p109
      %p112 = scmp.ne.s32.totalorder %s97, %s111
      %p113 = scmp.eq.s32.totalorder %s24, 0
      %p114 = por %p112, %p113
      %s116 = sadd.s32 %s115, 1
      %p119 = scmp.eq.s32.totalorder %s18, 1
      %p120 = scmp.ne.s32.totalorder %s115, %s117
      %p121 = scmp.eq.s32.totalorder %s18, 0
      %p122 = por %p120, %p121
      %p123 = scmp.ne.s32.totalorder %s115, %s117
      %p124 = scmp.eq.s32.totalorder %s23, 1
      %p125 = por %p123, %p124
      %p126 = scmp.ne.s32.totalorder %s117, %s118
      %p127 = scmp.eq.s32.totalorder %s23, 0
      %p128 = por %p126, %p127
      %p129 = scmp.ne.s32.totalorder %s117, %s118
      %p130 = scmp.eq.s32.totalorder %s24, 1
      %p131 = por %p129, %p130
      %p133 = scmp.ne.s32.totalorder %s118, %s132
      %p134 = scmp.eq.s32.totalorder %s24, 0
      %p135 = por %p133, %p134
      %s137 = sadd.s32 %s136, 1
      %p140 = scmp.eq.s32.totalorder %s18, 1
      %p141 = scmp.ne.s32.totalorder %s136, %s138
      %p142 = scmp.eq.s32.totalorder %s18, 0
      %p143 = por %p141, %p142
      %p144 = scmp.ne.s32.totalorder %s136, %s138
      %p145 = scmp.eq.s32.totalorder %s23, 1
      %p146 = por %p144, %p145
      %p147 = scmp.ne.s32.totalorder %s138, %s139
      %p148 = scmp.eq.s32.totalorder %s23, 0
      %p149 = por %p147, %p148
      %p150 = scmp.ne.s32.totalorder %s138, %s139
      %p151 = scmp.eq.s32.totalorder %s24, 1
      %p152 = por %p150, %p151
      %p154 = scmp.ne.s32.totalorder %s139, %s153
      %p155 = scmp.eq.s32.totalorder %s24, 0
      %p156 = por %p154, %p155
      %s158 = sadd.s32 %s157, 1
      %p161 = scmp.eq.s32.totalorder %s18, 1
      %p162 = scmp.ne.s32.totalorder %s157, %s159
      %p163 = scmp.eq.s32.totalorder %s18, 0
      %p164 = por %p162, %p163
      %p165 = scmp.ne.s32.totalorder %s157, %s159
      %p166 = scmp.eq.s32.totalorder %s23, 1
      %p167 = por %p165, %p166
      %p168 = scmp.ne.s32.totalorder %s159, %s160
      %p169 = scmp.eq.s32.totalorder %s23, 0
      %p170 = por %p168, %p169
      %p171 = scmp.ne.s32.totalorder %s159, %s160
      %p172 = scmp.eq.s32.totalorder %s24, 1
      %p173 = por %p171, %p172
      %p175 = scmp.ne.s32.totalorder %s160, %s174
      %p176 = scmp.eq.s32.totalorder %s24, 0
      %p177 = por %p175, %p176
      %s179 = sadd.s32 %s178, 1
      %p182 = scmp.eq.s32.totalorder %s18, 1
      %p183 = scmp.ne.s32.totalorder %s178, %s180
      %p184 = scmp.eq.s32.totalorder %s18, 0
      %p185 = por %p183, %p184
      %p186 = scmp.ne.s32.totalorder %s178, %s180
      %p187 = scmp.eq.s32.totalorder %s23, 1
      %p188 = por %p186, %p187
      %p189 = scmp.ne.s32.totalorder %s180, %s181
      %p190 = scmp.eq.s32.totalorder %s23, 0
      %p191 = por %p189, %p190
      %p192 = scmp.ne.s32.totalorder %s180, %s181
      %p193 = scmp.eq.s32.totalorder %s24, 1
      %p194 = por %p192, %p193
      %p196 = scmp.ne.s32.totalorder %s181, %s195
      %p197 = scmp.eq.s32.totalorder %s24, 0
      %p198 = por %p196, %p197
      %s200 = sadd.s32 %s199, 1
      %p203 = scmp.eq.s32.totalorder %s18, 1
      %p204 = scmp.ne.s32.totalorder %s199, %s201
      %p205 = scmp.eq.s32.totalorder %s18, 0
      %p206 = por %p204, %p205
      %p207 = scmp.ne.s32.totalorder %s199, %s201
      %p208 = scmp.eq.s32.totalorder %s23, 1
      %p209 = por %p207, %p208
      %p210 = scmp.ne.s32.totalorder %s201, %s202
      %p211 = scmp.eq.s32.totalorder %s23, 0
      %p212 = por %p210, %p211
      %p213 = scmp.ne.s32.totalorder %s201, %s202
      %p214 = scmp.eq.s32.totalorder %s24, 1
      %p215 = por %p213, %p214
      %p217 = scmp.ne.s32.totalorder %s202, %s216
      %p218 = scmp.eq.s32.totalorder %s24, 0
      %p219 = por %p217, %p218
      %s220 = ssub.s32 %s18, %s25
      %p221 = scmp.eq.s32.totalorder %s220, 0
      %s223 = sadd.s32 %s222, 1
      %s224 = scalar_select %p221, %s222, %s223
      %p227 = pneg %p221
      %p228 = scmp.eq.s32.totalorder %s18, 1
      %p229 = por %p227, %p228
      %p230 = scmp.ne.s32.totalorder %s222, %s225
      %p231 = scmp.eq.s32.totalorder %s18, 0
      %p232 = por %p230, %p231
      %p233 = scmp.ne.s32.totalorder %s222, %s225
      %p234 = scmp.eq.s32.totalorder %s23, 1
      %p235 = por %p233, %p234
      %p236 = scmp.ne.s32.totalorder %s225, %s226
      %p237 = scmp.eq.s32.totalorder %s23, 0
      %p238 = por %p236, %p237
      %p239 = scmp.ne.s32.totalorder %s225, %s226
      %p240 = scmp.eq.s32.totalorder %s24, 1
      %p241 = por %p239, %p240
      %p243 = scmp.ne.s32.totalorder %s226, %s242
      %p244 = scmp.eq.s32.totalorder %s24, 0
      %p245 = por %p243, %p244
      %p246 = scmp.le.s32.totalorder 1, %s18
      %p247 = scmp.lt.s32.totalorder %s18, 3
      %p248 = pnand %p246, %p247
      %p249 = pneg %p248
      // Predicated region
      $region9: #{dinov2_patch_tokens.1} parent=5 // pred_check
        _
      $region10: #{dinov2_patch_tokens.1} parent=5 // pred_check_branch
        %251 = sbr.rel (%p248) target = $region12
      $region11: #{dinov2_patch_tokens.1} parent=5 // pred_region
        %s252 = ssub.s32 %s18, 1
        // Predicated region
        $region13: #{dinov2_patch_tokens.1} parent=11 // pred_check
          %p253 = pneg %p65
        $region14: #{dinov2_patch_tokens.1} parent=11 // pred_check_branch
          %255 = sbr.rel (%p253) target = $region16
        $region15: #{dinov2_patch_tokens.1} parent=11 // pred_region
          _
        $region16: #{dinov2_patch_tokens.1} parent=11 // pred_fallthru
          _
        // Predicated region
        $region17: #{dinov2_patch_tokens.1} parent=11 // pred_check
          %p256 = pneg %p86
        $region18: #{dinov2_patch_tokens.1} parent=11 // pred_check_branch
          %258 = sbr.rel (%p256) target = $region20
        $region19: #{dinov2_patch_tokens.1} parent=11 // pred_region
          _
        $region20: #{dinov2_patch_tokens.1} parent=11 // pred_fallthru
          _
        // Predicated region
        $region21: #{dinov2_patch_tokens.1} parent=11 // pred_check
          %p259 = pneg %p107
        $region22: #{dinov2_patch_tokens.1} parent=11 // pred_check_branch
          %261 = sbr.rel (%p259) target = $region24
        $region23: #{dinov2_patch_tokens.1} parent=11 // pred_region
          _
        $region24: #{dinov2_patch_tokens.1} parent=11 // pred_fallthru
          _
        // Predicated region
        $region25: #{dinov2_patch_tokens.1} parent=11 // pred_check
          %p262 = pneg %p128
        $region26: #{dinov2_patch_tokens.1} parent=11 // pred_check_branch
          %264 = sbr.rel (%p262) target = $region28
        $region27: #{dinov2_patch_tokens.1} parent=11 // pred_region
          _
        $region28: #{dinov2_patch_tokens.1} parent=11 // pred_fallthru
          _
        // Predicated region
        $region29: #{dinov2_patch_tokens.1} parent=11 // pred_check
          %p265 = pneg %p149
        $region30: #{dinov2_patch_tokens.1} parent=11 // pred_check_branch
          %267 = sbr.rel (%p265) target = $region32
        $region31: #{dinov2_patch_tokens.1} parent=11 // pred_region
          _
        $region32: #{dinov2_patch_tokens.1} parent=11 // pred_fallthru
          _
        // Predicated region
        $region33: #{dinov2_patch_tokens.1} parent=11 // pred_check
          %p268 = pneg %p170
        $region34: #{dinov2_patch_tokens.1} parent=11 // pred_check_branch
          %270 = sbr.rel (%p268) target = $region36
        $region35: #{dinov2_patch_tokens.1} parent=11 // pred_region
          _
        $region36: #{dinov2_patch_tokens.1} parent=11 // pred_fallthru
          _
        // Predicated region
        $region37: #{dinov2_patch_tokens.1} parent=11 // pred_check
          %p271 = pneg %p191
        $region38: #{dinov2_patch_tokens.1} parent=11 // pred_check_branch
          %273 = sbr.rel (%p271) target = $region40
        $region39: #{dinov2_patch_tokens.1} parent=11 // pred_region
          _
        $region40: #{dinov2_patch_tokens.1} parent=11 // pred_fallthru
          _
        // Predicated region
        $region41: #{dinov2_patch_tokens.1} parent=11 // pred_check
          %p274 = pneg %p212
        $region42: #{dinov2_patch_tokens.1} parent=11 // pred_check_branch
          %276 = sbr.rel (%p274) target = $region44
        $region43: #{dinov2_patch_tokens.1} parent=11 // pred_region
          _
        $region44: #{dinov2_patch_tokens.1} parent=11 // pred_fallthru
          _
      $region12: #{dinov2_patch_tokens.1} parent=5 // pred_fallthru
        _
      %p277 = scmp.lt.s32.totalorder %s18, 2
      // Predicated region
      $region45: #{dinov2_patch_tokens.1} parent=5 // pred_check
        %p278 = pneg %p277
      $region46: #{dinov2_patch_tokens.1} parent=5 // pred_check_branch
        %280 = sbr.rel (%p278) target = $region48
      $region47: #{dinov2_patch_tokens.1} parent=5 // pred_region
        // Predicated region
        $region49: #{dinov2_patch_tokens.1} parent=47 // pred_check
          %p281 = pneg %p38
        $region50: #{dinov2_patch_tokens.1} parent=47 // pred_check_branch
          %283 = sbr.rel (%p281) target = $region52
        $region51: #{dinov2_patch_tokens.1} parent=47 // pred_region
          %p284 = scmp.lt.s32.totalorder %s18, 1
          %s285 = scalar_select %p284, %s18, 1
          %s286 = smul.addr %s285, 10
          %s287 = smul.addr %s286, 4
          %s288 = scalar_lea.vmem %s0, %s287
        $region52: #{dinov2_patch_tokens.1} parent=47 // pred_fallthru
          _
      $region48: #{dinov2_patch_tokens.1} parent=5 // pred_fallthru
        _
      %p289 = scmp.le.s32.totalorder 1, %s18
      %p290 = scmp.lt.s32.totalorder %s18, 3
      %p291 = pnand %p289, %p290
      %p292 = pneg %p291
      // Predicated region
      $region53: #{dinov2_patch_tokens.1} parent=5 // pred_check
        _
      $region54: #{dinov2_patch_tokens.1} parent=5 // pred_check_branch
        %294 = sbr.rel (%p291) target = $region56
      $region55: #{dinov2_patch_tokens.1} parent=5 // pred_region
        %s295 = ssub.s32 %s18, 1
        %p296 = scmp.lt.s32.totalorder %s23, 1
        %s297 = scalar_select %p296, %s23, 1
        %s298 = smul.addr %s297, 10
        %s299 = smul.addr %s298, 4
        %s300 = scalar_lea.vmem %s0, %s299
        %p301 = pneg %p44
        %p302 = pneg %p41
        %p303 = pneg %p65
        %p304 = pneg %p62
        %p305 = pneg %p86
        %p306 = pneg %p83
        %p307 = pneg %p107
        %p308 = pneg %p104
        %p309 = pneg %p128
        %p310 = pneg %p125
        %p311 = pneg %p149
        %p312 = pneg %p146
        %p313 = pneg %p170
        %p314 = pneg %p167
        %p315 = pneg %p191
        %p316 = pneg %p188
        %p317 = pneg %p212
        %p318 = pneg %p209
        %p319 = pneg %p238
        %p320 = pneg %p235
        %s321 = sand.u32 %s225, 1
        %s322 = scalar_lea.sflag [#allocation4], %s321
        %s323 = sand.u32 %s225, 1
        %s324 = smul.addr %s323, 4
        %s325 = scalar_lea.vmem [#allocation3], %s324
        %p326 = scmp.lt.s32.totalorder %s23, 1
        %s327 = scalar_select %p326, %s23, 1
        %s328 = smul.addr %s327, 10
        %s329 = smul.addr %s328, 4
        %s330 = scalar_lea.vmem %s0, %s329
        %v332 = vld [vmem:[%s330] sm:$0xff]
        %v333 = vld [vmem:[%s330 + $0x8] sm:$0xff]
        %v334 = vld [vmem:[%s330 + $0x10] sm:$0xf]
        %v335 = vld [vmem:[%s330 + $0x14] sm:$0x11]
        %v336 = vld [vmem:[%s330 + $0x1c] sm:$0x11]
        %v337 = vld [vmem:[%s330 + $0x24] sm:$0x1]
        %v338 = vld [vmem:[%s1] sm:$0xf]
        %v339 = vld [vmem:[%s1 + $0x4] sm:$0xf]
        %v340 = vld [vmem:[%s1 + $0x8] sm:$0xf]
        %v341 = vld [vmem:[%s1 + $0xc] sm:$0xf]
        %v342 = vld [vmem:[%s1 + $0x10] sm:$0xf]
        %v343 = vld [vmem:[%s1 + $0x14] sm:$0xf]
        %v344 = vld [vmem:[%s1 + $0x18] sm:$0xf]
        %v345 = vld [vmem:[%s1 + $0x1c] sm:$0xf]
        %v346 = vld [vmem:[%s1 + $0x20] sm:$0xf]
        %v347 = vld [vmem:[%s1 + $0x24] sm:$0xf]
        %v348 = vld [vmem:[%s1 + $0x28] sm:$0xf]
        %v349 = vld [vmem:[%s1 + $0x2c] sm:$0xf]
        %v350 = vld [vmem:[%s1 + $0x30] sm:$0xf]
        %v351 = vld [vmem:[%s1 + $0x34] sm:$0xf]
        %v352 = vld [vmem:[%s1 + $0x38] sm:$0xf]
        %v353 = vld [vmem:[%s1 + $0x3c] sm:$0xf]
        %v354 = vld [vmem:[%s1 + $0x40] sm:$0xf]
        %v355 = vld [vmem:[%s1 + $0x44] sm:$0xf]
        %v356 = vld [vmem:[%s1 + $0x48] sm:$0xf]
        %v357 = vld [vmem:[%s1 + $0x4c] sm:$0xf]
        %v358 = vld [vmem:[%s1 + $0x50] sm:$0xf]
        %v359 = vld [vmem:[%s1 + $0x54] sm:$0xf]
        %v360 = vld [vmem:[%s1 + $0x58] sm:$0xf]
        %v361 = vld [vmem:[%s1 + $0x5c] sm:$0xf]
        %v362 = vld [vmem:[%s1 + $0x60] sm:$0xf]
        %v363 = vld [vmem:[%s1 + $0x64] sm:$0xf]
        %v364 = vld [vmem:[%s1 + $0x68] sm:$0xf]
        %v365 = vld [vmem:[%s1 + $0x6c] sm:$0xf]
        %v366 = vld [vmem:[%s1 + $0x70] sm:$0xf]
        %v367 = vld [vmem:[%s1 + $0x74] sm:$0xf]
        %v368 = vld [vmem:[%s1 + $0x78] sm:$0xf]
        %v369 = vld [vmem:[%s1 + $0x7c] sm:$0xf]
        %v370 = vld [vmem:[%s1 + $0x80] sm:$0xf]
        %v371 = vld [vmem:[%s1 + $0x84] sm:$0xf]
        %v372 = vld [vmem:[%s1 + $0x88] sm:$0xf]
        %v373 = vld [vmem:[%s1 + $0x8c] sm:$0xf]
        %v374 = vld [vmem:[%s1 + $0x90] sm:$0xf]
        %v375 = vld [vmem:[%s1 + $0x94] sm:$0xf]
        %v376 = vld [vmem:[%s1 + $0x98] sm:$0xf]
        %v377 = vld [vmem:[%s1 + $0x9c] sm:$0xf]
        %v378 = vld [vmem:[%s1 + $0xa0] sm:$0xf]
        %v379 = vld [vmem:[%s1 + $0xa4] sm:$0xf]
        %v380 = vld [vmem:[%s1 + $0xa8] sm:$0xf]
        %v381 = vld [vmem:[%s1 + $0xac] sm:$0xf]
        %v382 = vld [vmem:[%s1 + $0xb0] sm:$0xf]
        %v383 = vld [vmem:[%s1 + $0xb4] sm:$0xf]
        %v384 = vld [vmem:[%s1 + $0xb8] sm:$0xf]
        %v385 = vld [vmem:[%s1 + $0xbc] sm:$0xf]
        %v386 = vld [vmem:[%s1 + $0xc0] sm:$0xf]
        %v387 = vld [vmem:[%s1 + $0xc4] sm:$0xf]
        %v388 = vld [vmem:[%s1 + $0xc8] sm:$0xf]
        %v389 = vld [vmem:[%s1 + $0xcc] sm:$0xf]
        %v390 = vld [vmem:[%s1 + $0xd0] sm:$0xf]
        %v391 = vld [vmem:[%s1 + $0xd4] sm:$0xf]
        %v392 = vld [vmem:[%s1 + $0xd8] sm:$0xf]
        %v393 = vld [vmem:[%s1 + $0xdc] sm:$0xf]
        %v394 = vld [vmem:[%s1 + $0xe0] sm:$0xf]
        %v395 = vld [vmem:[%s1 + $0xe4] sm:$0xf]
        %v396 = vld [vmem:[%s1 + $0xe8] sm:$0xf]
        %v397 = vld [vmem:[%s1 + $0xec] sm:$0xf]
        %v398 = vld [vmem:[%s1 + $0xf0] sm:$0xf]
        %v399 = vld [vmem:[%s1 + $0xf4] sm:$0xf]
        %v400 = vld [vmem:[%s1 + $0xf8] sm:$0xf]
        %v401 = vld [vmem:[%s1 + $0xfc] sm:$0xf]
        %v402 = vld [vmem:[%s1 + $0x100] sm:$0xf]
        %v403 = vld [vmem:[%s1 + $0x104] sm:$0xf]
        %v404 = vld [vmem:[%s1 + $0x108] sm:$0xf]
        %v405 = vld [vmem:[%s1 + $0x10c] sm:$0xf]
        %v406 = vld [vmem:[%s1 + $0x110] sm:$0xf]
        %v407 = vld [vmem:[%s1 + $0x114] sm:$0xf]
        %v408 = vld [vmem:[%s1 + $0x118] sm:$0xf]
        %v409 = vld [vmem:[%s1 + $0x11c] sm:$0xf]
        %v410 = vld [vmem:[%s1 + $0x120] sm:$0xf]
        %v411 = vld [vmem:[%s1 + $0x124] sm:$0x3]
        %v412 = vld [vmem:[%s2] sm:$0xff]
        %v413 = vld [vmem:[%s2 + $0x8] sm:$0x1]
        %v420 = vunpack.c.l.b16 %v332
        %v421 = vunpack.c.h.b16 %v332
        %v422 = vunpack.c.l.b16 %v333
        %v423 = vunpack.c.h.b16 %v333
        %v424 = vunpack.c.l.b16 %v334
        %v425 = vunpack.c.l.b16 %v335
        %v426 = vunpack.c.h.b16 %v335
        %v427 = vunpack.c.l.b16 %v336
        %v428 = vunpack.c.h.b16 %v336
        %v429 = vunpack.c.l.b16 %v337
        %v430 = vpack.c.b16 %v425, %v420
        %v431 = vpack.c.b16 %v426, %v421
        %v432 = vpack.c.b16 %v427, %v422
        %v433 = vpack.c.b16 %v428, %v423
        %v434 = vpack.c.b16 %v429, %v424
        %v513 = vunpack.c.l.b16 %v338
        %v514 = vunpack.c.l.b16 %v339
        %v515 = vunpack.c.l.b16 %v340
        %v516 = vunpack.c.l.b16 %v341
        %v517 = vunpack.c.l.b16 %v342
        %v518 = vunpack.c.l.b16 %v343
        %v519 = vunpack.c.l.b16 %v344
        %v520 = vunpack.c.l.b16 %v345
        %v521 = vunpack.c.l.b16 %v346
        %v522 = vunpack.c.l.b16 %v347
        %v523 = vunpack.c.l.b16 %v348
        %v524 = vunpack.c.l.b16 %v349
        %v525 = vunpack.c.l.b16 %v350
        %v526 = vunpack.c.l.b16 %v351
        %v527 = vunpack.c.l.b16 %v352
        %v528 = vunpack.c.l.b16 %v353
        %v529 = vunpack.c.l.b16 %v354
        %v530 = vunpack.c.l.b16 %v355
        %v531 = vunpack.c.l.b16 %v356
        %v532 = vunpack.c.l.b16 %v357
        %v533 = vunpack.c.l.b16 %v358
        %v534 = vunpack.c.l.b16 %v359
        %v535 = vunpack.c.l.b16 %v360
        %v536 = vunpack.c.l.b16 %v361
        %v537 = vunpack.c.l.b16 %v362
        %v538 = vunpack.c.l.b16 %v363
        %v539 = vunpack.c.l.b16 %v364
        %v540 = vunpack.c.l.b16 %v365
        %v541 = vunpack.c.l.b16 %v366
        %v542 = vunpack.c.l.b16 %v367
        %v543 = vunpack.c.l.b16 %v368
        %v544 = vunpack.c.l.b16 %v369
        %v545 = vunpack.c.l.b16 %v370
        %v546 = vunpack.c.l.b16 %v371
        %v547 = vunpack.c.l.b16 %v372
        %v548 = vunpack.c.l.b16 %v373
        %v549 = vunpack.c.l.b16 %v374
        %v550 = vunpack.c.l.b16 %v375
        %v551 = vunpack.c.l.b16 %v376
        %v552 = vunpack.c.l.b16 %v377
        %v553 = vunpack.c.l.b16 %v378
        %v554 = vunpack.c.l.b16 %v379
        %v555 = vunpack.c.l.b16 %v380
        %v556 = vunpack.c.l.b16 %v381
        %v557 = vunpack.c.l.b16 %v382
        %v558 = vunpack.c.l.b16 %v383
        %v559 = vunpack.c.l.b16 %v384
        %v560 = vunpack.c.l.b16 %v385
        %v561 = vunpack.c.l.b16 %v386
        %v562 = vunpack.c.l.b16 %v387
        %v563 = vunpack.c.l.b16 %v388
        %v564 = vunpack.c.l.b16 %v389
        %v565 = vunpack.c.l.b16 %v390
        %v566 = vunpack.c.l.b16 %v391
        %v567 = vunpack.c.l.b16 %v392
        %v568 = vunpack.c.l.b16 %v393
        %v569 = vunpack.c.l.b16 %v394
        %v570 = vunpack.c.l.b16 %v395
        %v571 = vunpack.c.l.b16 %v396
        %v572 = vunpack.c.l.b16 %v397
        %v573 = vunpack.c.l.b16 %v398
        %v574 = vunpack.c.l.b16 %v399
        %v575 = vunpack.c.l.b16 %v400
        %v576 = vunpack.c.l.b16 %v401
        %v577 = vunpack.c.l.b16 %v402
        %v578 = vunpack.c.l.b16 %v403
        %v579 = vunpack.c.l.b16 %v404
        %v580 = vunpack.c.l.b16 %v405
        %v581 = vunpack.c.l.b16 %v406
        %v582 = vunpack.c.l.b16 %v407
        %v583 = vunpack.c.l.b16 %v408
        %v584 = vunpack.c.l.b16 %v409
        %v585 = vunpack.c.l.b16 %v410
        %v586 = vunpack.c.l.b16 %v411
        %v587 = vpack.c.b16 %v514, %v513
        %v588 = vpack.c.b16 %v516, %v515
        %v589 = vpack.c.b16 %v518, %v517
        %v590 = vpack.c.b16 %v520, %v519
        %v591 = vpack.c.b16 %v522, %v521
        %v592 = vpack.c.b16 %v524, %v523
        %v593 = vpack.c.b16 %v526, %v525
        %v594 = vpack.c.b16 %v528, %v527
        %v595 = vpack.c.b16 %v530, %v529
        %v596 = vpack.c.b16 %v532, %v531
        %v597 = vpack.c.b16 %v534, %v533
        %v598 = vpack.c.b16 %v536, %v535
        %v599 = vpack.c.b16 %v538, %v537
        %v600 = vpack.c.b16 %v540, %v539
        %v601 = vpack.c.b16 %v542, %v541
        %v602 = vpack.c.b16 %v544, %v543
        %v603 = vpack.c.b16 %v546, %v545
        %v604 = vpack.c.b16 %v548, %v547
        %v605 = vpack.c.b16 %v550, %v549
        %v606 = vpack.c.b16 %v552, %v551
        %v607 = vpack.c.b16 %v554, %v553
        %v608 = vpack.c.b16 %v556, %v555
        %v609 = vpack.c.b16 %v558, %v557
        %v610 = vpack.c.b16 %v560, %v559
        %v611 = vpack.c.b16 %v562, %v561
        %v612 = vpack.c.b16 %v564, %v563
        %v613 = vpack.c.b16 %v566, %v565
        %v614 = vpack.c.b16 %v568, %v567
        %v615 = vpack.c.b16 %v570, %v569
        %v616 = vpack.c.b16 %v572, %v571
        %v617 = vpack.c.b16 %v574, %v573
        %v618 = vpack.c.b16 %v576, %v575
        %v619 = vpack.c.b16 %v578, %v577
        %v620 = vpack.c.b16 %v580, %v579
        %v621 = vpack.c.b16 %v582, %v581
        %v622 = vpack.c.b16 %v584, %v583
        %v623 = vpack.c.b16 %v586, %v585
        %vm660 = vcmask 621568
        %v662 = vsel %vm660, %v434, 0
        %vm664 = vcmask 1045504
        %v666 = vsel %vm664, %v623, 0
        %668 = vmatprep.subr.bf16.mxu0 0
        %669 = vmatpush1.bf16.msra.mxu0 %v587
        %670 = vmatprep.subr.bf16.mxu0 0
        %671 = vmatpush1.bf16.msra.mxu0 %v588
        %672 = vmatprep.subr.bf16.mxu0 0
        %673 = vmatpush1.bf16.msra.mxu0 %v589
        %674 = vmatprep.subr.bf16.mxu0 0
        %675 = vmatpush1.bf16.msra.mxu0 %v590
        %676 = vmatprep.subr.bf16.mxu0 0
        %677 = vmatpush1.bf16.msra.mxu0 %v591
        %678 = vmatprep.subr.bf16.mxu0 0
        %679 = vmatpush1.bf16.msra.mxu0 %v592
        %680 = vmatprep.subr.bf16.mxu0 0
        %681 = vmatpush1.bf16.msra.mxu0 %v593
        %682 = vmatprep.subr.bf16.mxu0 0
        %683 = vmatpush1.bf16.msra.mxu0 %v594
        %684 = vmatprep.subr.bf16.mxu0 0
        %685 = vmatpush1.bf16.msra.mxu0 %v595
        %686 = vmatprep.subr.bf16.mxu0 0
        %687 = vmatpush1.bf16.msra.mxu0 %v596
        %688 = vmatprep.subr.bf16.mxu0 0
        %689 = vmatpush1.bf16.msra.mxu0 %v597
        %690 = vmatprep.subr.bf16.mxu0 0
        %691 = vmatpush1.bf16.msra.mxu0 %v598
        %692 = vmatprep.subr.bf16.mxu0 0
        %693 = vmatpush1.bf16.msra.mxu0 %v599
        %694 = vmatprep.subr.bf16.mxu0 0
        %695 = vmatpush1.bf16.msra.mxu0 %v600
        %696 = vmatprep.subr.bf16.mxu0 0
        %697 = vmatpush1.bf16.msra.mxu0 %v601
        %698 = vmatprep.subr.bf16.mxu0 0
        %699 = vmatpush1.bf16.msra.mxu0 %v602
        %700 = vmatprep.mubr.bf16.mxu0 %v431
        %701 = vmatmul.mubr.bf16.gmra.mrb[0].mxu0 %v430
        %v702 = vpop.f32.mrb[0].mxu0
        %v703 = vadd.f32 %v412, %v702
        %v704 = vpop.f32.mrb[0].mxu0
        %v705 = vpop.f32.mrb[0].mxu0
        %v706 = vadd.f32 %v413, %v705
        %v707 = vpop.f32.mrb[0].mxu0
        %708 = vdwg.mxu0
        %709 = vmatprep.subr.bf16.mxu0 0
        %710 = vmatpush1.bf16.msra.mxu0 %v603
        %711 = vmatprep.subr.bf16.mxu0 0
        %712 = vmatpush1.bf16.msra.mxu0 %v604
        %713 = vmatprep.subr.bf16.mxu0 0
        %714 = vmatpush1.bf16.msra.mxu0 %v605
        %715 = vmatprep.subr.bf16.mxu0 0
        %716 = vmatpush1.bf16.msra.mxu0 %v606
        %717 = vmatprep.subr.bf16.mxu0 0
        %718 = vmatpush1.bf16.msra.mxu0 %v607
        %719 = vmatprep.subr.bf16.mxu0 0
        %720 = vmatpush1.bf16.msra.mxu0 %v608
        %721 = vmatprep.subr.bf16.mxu0 0
        %722 = vmatpush1.bf16.msra.mxu0 %v609
        %723 = vmatprep.subr.bf16.mxu0 0
        %724 = vmatpush1.bf16.msra.mxu0 %v610
        %725 = vmatprep.subr.bf16.mxu0 0
        %726 = vmatpush1.bf16.msra.mxu0 %v611
        %727 = vmatprep.subr.bf16.mxu0 0
        %728 = vmatpush1.bf16.msra.mxu0 %v612
        %729 = vmatprep.subr.bf16.mxu0 0
        %730 = vmatpush1.bf16.msra.mxu0 %v613
        %731 = vmatprep.subr.bf16.mxu0 0
        %732 = vmatpush1.bf16.msra.mxu0 %v614
        %733 = vmatprep.subr.bf16.mxu0 0
        %734 = vmatpush1.bf16.msra.mxu0 %v615
        %735 = vmatprep.subr.bf16.mxu0 0
        %736 = vmatpush1.bf16.msra.mxu0 %v616
        %737 = vmatprep.subr.bf16.mxu0 0
        %738 = vmatpush1.bf16.msra.mxu0 %v617
        %739 = vmatprep.subr.bf16.mxu0 0
        %740 = vmatpush1.bf16.msra.mxu0 %v618
        %741 = vmatprep.mubr.bf16.mxu0 %v433
        %742 = vmatmul.mubr.bf16.gmra.mrb[0].mxu0 %v432
        %v743 = vpop.f32.mrb[0].mxu0
        %v744 = vadd.f32 %v703, %v743
        %v745 = vpop.f32.mrb[0].mxu0
        %v746 = vpop.f32.mrb[0].mxu0
        %v747 = vadd.f32 %v706, %v746
        %v748 = vpop.f32.mrb[0].mxu0
        %749 = vdwg.mxu0
        %750 = vmatprep.subr.bf16.mxu0 0
        %751 = vmatpush1.bf16.msra.mxu0 %v619
        %752 = vmatprep.subr.bf16.mxu0 0
        %753 = vmatpush1.bf16.msra.mxu0 %v620
        %754 = vmatprep.subr.bf16.mxu0 0
        %755 = vmatpush1.bf16.msra.mxu0 %v621
        %756 = vmatprep.subr.bf16.mxu0 0
        %757 = vmatpush1.bf16.msra.mxu0 %v622
        %758 = vmatprep.subr.bf16.mxu0 0
        %759 = vmatpush1.bf16.msra.mxu0 %v666
        %760 = vmatprep.subr.bf16.mxu0 0
        %761 = vmatpush1.bf16.msra.mxu0 0
        %762 = vmatprep.subr.bf16.mxu0 0
        %763 = vmatpush1.bf16.msra.mxu0 0
        %764 = vmatprep.subr.bf16.mxu0 0
        %765 = vmatpush1.bf16.msra.mxu0 0
        %766 = vmatprep.subr.bf16.mxu0 0
        %767 = vmatpush1.bf16.msra.mxu0 0
        %768 = vmatprep.subr.bf16.mxu0 0
        %769 = vmatpush1.bf16.msra.mxu0 0
        %770 = vmatprep.subr.bf16.mxu0 0
        %771 = vmatpush1.bf16.msra.mxu0 0
        %772 = vmatprep.subr.bf16.mxu0 0
        %773 = vmatpush1.bf16.msra.mxu0 0
        %774 = vmatprep.subr.bf16.mxu0 0
        %775 = vmatpush1.bf16.msra.mxu0 0
        %776 = vmatprep.subr.bf16.mxu0 0
        %777 = vmatpush1.bf16.msra.mxu0 0
        %778 = vmatprep.subr.bf16.mxu0 0
        %779 = vmatpush1.bf16.msra.mxu0 0
        %780 = vmatprep.subr.bf16.mxu0 0
        %781 = vmatpush1.bf16.msra.mxu0 0
        %782 = vmatprep.mubr.bf16.mxu0 0
        %783 = vmatmul.mubr.bf16.gmra.mrb[0].mxu0 %v662
        %v784 = vpop.f32.mrb[0].mxu0
        %v785 = vadd.f32 %v744, %v784
        %v786 = vpop.f32.mrb[0].mxu0
        %v787 = vpop.f32.mrb[0].mxu0
        %v788 = vadd.f32 %v747, %v787
        %v789 = vpop.f32.mrb[0].mxu0
        %790 = vdwg.mxu0
        %vm791 = vcmask 261120
        %792 = vst.msk [vmem:[#allocation2] sm:$0xff] %vm791, %v785
        %vm793 = vcmask 253952
        %794 = vst.msk [vmem:[#allocation2 + $0x8] sm:$0x1] %vm793, %v788
        loop: start=0, step=1, limit=2
        $region57: #{dinov2_patch_tokens.1} parent=55 // loop_pre_header
          _
        $region58: #{dinov2_patch_tokens.1} parent=55 // loop_header
          %s796 = sphi 0, %s800
          %p797 = scmp.ge.s32.totalorder %s796, 2
        $region59: #{dinov2_patch_tokens.1} parent=55 // loop_header_branch
          %799 = sbr.rel (%p797) target = $region63
        $region60: #{dinov2_patch_tokens.1} parent=55 // loop_body
          %v801 = vld [vmem:[#allocation2] sm:$0xff]
          %v802 = vld [vmem:[#allocation2 + $0x8] sm:$0x1]
          %s803 = smul.u32 %s796, 16
          %s804 = scalar_lea.vmem %s7, %s803
          %v805 = vld [vmem:[%s804] sm:$0x1]
          %v806 = vld [vmem:[%s804 + $0x1] sm:$0x1]
          %v807 = vsel %vm791, %v801, 0.0
          %808 = vadd.xlane.f32.xlu0 %v807
          %v809 = vpop.xlane.xlu0 %808
          %v810 = vsel %vm793, %v802, 0.0
          %811 = vadd.xlane.f32.xlu0 %v810
          %v812 = vpop.xlane.xlu0 %811
          %v813 = vrcp.pop 32.0
          %v814 = vmul.f32 %v809, %v813
          %v815 = vmul.f32 %v812, %v813
          %v816 = vsub.f32 %v801, %v814
          %v817 = vsub.f32 %v802, %v815
          %v818 = vmul.f32 %v816, %v816
          %v819 = vmul.f32 %v817, %v817
          %v820 = vsel %vm791, %v818, 0.0
          %821 = vadd.xlane.f32.xlu0 %v820
          %v822 = vpop.xlane.xlu0 %821
          %v823 = vsel %vm793, %v819, 0.0
          %824 = vadd.xlane.f32.xlu0 %v823
          %v825 = vpop.xlane.xlu0 %824
          %v826 = vmul.f32 %v822, %v813
          %v827 = vmul.f32 %v825, %v813
          %v828 = vadd.f32 %v826, 1e-06
          %v829 = vadd.f32 %v827, 1e-06
          %v830 = vrsqrt.pop %v828
          %v831 = vrsqrt.pop %v829
          %v832 = vmul.f32 %v816, %v830
          %v833 = vmul.f32 %v817, %v831
          %v834 = vlaneseq
          %v835 = vshrl.u32 %v834, 7
          %v836 = vsub.s32 0, %v835
          %v837 = vrot.slane %v805, %v836
          %v838 = vmul.f32 %v832, %v837
          %v839 = vmul.f32 %v833, %v837
          %v840 = vlaneseq
          %v841 = vshrl.u32 %v840, 7
          %v842 = vsub.s32 0, %v841
          %v843 = vrot.slane %v806, %v842
          %v844 = vadd.f32 %v838, %v843
          %v845 = vadd.f32 %v839, %v843
          %v846 = vpack.c.bf16 %v845, %v844
          %v847 = vld [vmem:[%s804 + $0x2] sm:$0x1]
          %v848 = vlaneseq
          %v849 = vshrl.u32 %v848, 7
          %v850 = vsub.s32 0, %v849
          %v851 = vrot.slane %v847, %v850
          %s852 = smul.u32 %s796, 6
          %s853 = smul.u32 %s852, 4
          %s854 = smul.addr %s853, 4
          %s855 = scalar_lea.vmem %s3, %s854
          %v856 = vld [vmem:[%s855] sm:$0xf]
          %v857 = vld [vmem:[%s855 + $0x4] sm:$0xf]
          %v858 = vld [vmem:[%s855 + $0x8] sm:$0xf]
          %v859 = vld [vmem:[%s855 + $0xc] sm:$0xf]
          %v860 = vld [vmem:[%s804 + $0x9] sm:$0x1]
          %v861 = vlaneseq
          %v862 = vshrl.u32 %v861, 7
          %v863 = vsub.s32 0, %v862
          %v864 = vrot.slane %v860, %v863
          %v869 = vunpack.c.l.b16 %v856
          %v870 = vunpack.c.l.b16 %v857
          %v871 = vunpack.c.l.b16 %v858
          %v872 = vunpack.c.l.b16 %v859
          %v873 = vpack.c.b16 %v870, %v869
          %v874 = vpack.c.b16 %v872, %v871
          %v878 = vsel %vm791, %v846, 0
          %880 = vmatprep.subr.bf16.mxu0 0
          %881 = vmatpush1.bf16.msra.mxu0 %v873
          %882 = vmatprep.subr.bf16.mxu0 0
          %883 = vmatpush1.bf16.msra.mxu0 %v874
          %884 = vmatprep.subr.bf16.mxu0 0
          %885 = vmatpush1.bf16.msra.mxu0 0
          %886 = vmatprep.subr.bf16.mxu0 0
          %887 = vmatpush1.bf16.msra.mxu0 0
          %888 = vmatprep.subr.bf16.mxu0 0
          %889 = vmatpush1.bf16.msra.mxu0 0
          %890 = vmatprep.subr.bf16.mxu0 0
          %891 = vmatpush1.bf16.msra.mxu0 0
          %892 = vmatprep.subr.bf16.mxu0 0
          %893 = vmatpush1.bf16.msra.mxu0 0
          %894 = vmatprep.subr.bf16.mxu0 0
          %895 = vmatpush1.bf16.msra.mxu0 0
          %896 = vmatprep.subr.bf16.mxu0 0
          %897 = vmatpush1.bf16.msra.mxu0 0
          %898 = vmatprep.subr.bf16.mxu0 0
          %899 = vmatpush1.bf16.msra.mxu0 0
          %900 = vmatprep.subr.bf16.mxu0 0
          %901 = vmatpush1.bf16.msra.mxu0 0
          %902 = vmatprep.subr.bf16.mxu0 0
          %903 = vmatpush1.bf16.msra.mxu0 0
          %904 = vmatprep.subr.bf16.mxu0 0
          %905 = vmatpush1.bf16.msra.mxu0 0
          %906 = vmatprep.subr.bf16.mxu0 0
          %907 = vmatpush1.bf16.msra.mxu0 0
          %908 = vmatprep.subr.bf16.mxu0 0
          %909 = vmatpush1.bf16.msra.mxu0 0
          %910 = vmatprep.subr.bf16.mxu0 0
          %911 = vmatpush1.bf16.msra.mxu0 0
          %912 = vmatprep.mubr.bf16.mxu0 0
          %913 = vmatmul.mubr.bf16.gmra.mrb[0].mxu0 %v878
          %v914 = vpop.f32.mrb[0].mxu0
          %v915 = vadd.f32 %v864, %v914
          %v916 = vpop.f32.mrb[0].mxu0
          %v917 = vpop.f32.mrb[0].mxu0
          %v918 = vadd.f32 %v864, %v917
          %v919 = vpop.f32.mrb[0].mxu0
          %920 = vdwg.mxu0
          %s921 = sadd.s32 %s852, 1
          %s922 = smul.u32 %s921, 4
          %s923 = smul.addr %s922, 4
          %s924 = scalar_lea.vmem %s3, %s923
          %v925 = vld [vmem:[%s924] sm:$0xf]
          %v926 = vld [vmem:[%s924 + $0x4] sm:$0xf]
          %v927 = vld [vmem:[%s924 + $0x8] sm:$0xf]
          %v928 = vld [vmem:[%s924 + $0xc] sm:$0xf]
          %v929 = vld [vmem:[%s804 + $0xb] sm:$0x1]
          %v930 = vlaneseq
          %v931 = vshrl.u32 %v930, 7
          %v932 = vsub.s32 0, %v931
          %v933 = vrot.slane %v929, %v932
          %v938 = vunpack.c.l.b16 %v925
          %v939 = vunpack.c.l.b16 %v926
          %v940 = vunpack.c.l.b16 %v927
          %v941 = vunpack.c.l.b16 %v928
          %v942 = vpack.c.b16 %v939, %v938
          %v943 = vpack.c.b16 %v941, %v940
          %946 = vmatprep.subr.bf16.mxu0 0
          %947 = vmatpush1.bf16.msra.mxu0 %v942
          %948 = vmatprep.subr.bf16.mxu0 0
          %949 = vmatpush1.bf16.msra.mxu0 %v943
          %950 = vmatprep.subr.bf16.mxu0 0
          %951 = vmatpush1.bf16.msra.mxu0 0
          %952 = vmatprep.subr.bf16.mxu0 0
          %953 = vmatpush1.bf16.msra.mxu0 0
          %954 = vmatprep.subr.bf16.mxu0 0
          %955 = vmatpush1.bf16.msra.mxu0 0
          %956 = vmatprep.subr.bf16.mxu0 0
          %957 = vmatpush1.bf16.msra.mxu0 0
          %958 = vmatprep.subr.bf16.mxu0 0
          %959 = vmatpush1.bf16.msra.mxu0 0
          %960 = vmatprep.subr.bf16.mxu0 0
          %961 = vmatpush1.bf16.msra.mxu0 0
          %962 = vmatprep.subr.bf16.mxu0 0
          %963 = vmatpush1.bf16.msra.mxu0 0
          %964 = vmatprep.subr.bf16.mxu0 0
          %965 = vmatpush1.bf16.msra.mxu0 0
          %966 = vmatprep.subr.bf16.mxu0 0
          %967 = vmatpush1.bf16.msra.mxu0 0
          %968 = vmatprep.subr.bf16.mxu0 0
          %969 = vmatpush1.bf16.msra.mxu0 0
          %970 = vmatprep.subr.bf16.mxu0 0
          %971 = vmatpush1.bf16.msra.mxu0 0
          %972 = vmatprep.subr.bf16.mxu0 0
          %973 = vmatpush1.bf16.msra.mxu0 0
          %974 = vmatprep.subr.bf16.mxu0 0
          %975 = vmatpush1.bf16.msra.mxu0 0
          %976 = vmatprep.subr.bf16.mxu0 0
          %977 = vmatpush1.bf16.msra.mxu0 0
          %978 = vmatprep.mubr.bf16.mxu0 0
          %979 = vmatmul.mubr.bf16.gmra.mrb[0].mxu0 %v878
          %v980 = vpop.f32.mrb[0].mxu0
          %v981 = vadd.f32 %v933, %v980
          %v982 = vpop.f32.mrb[0].mxu0
          %v983 = vpop.f32.mrb[0].mxu0
          %v984 = vadd.f32 %v933, %v983
          %v985 = vpop.f32.mrb[0].mxu0
          %986 = vdwg.mxu0
          %s987 = sadd.s32 %s852, 2
          %s988 = smul.u32 %s987, 4
          %s989 = smul.addr %s988, 4
          %s990 = scalar_lea.vmem %s3, %s989
          %v991 = vld [vmem:[%s990] sm:$0xf]
          %v992 = vld [vmem:[%s990 + $0x4] sm:$0xf]
          %v993 = vld [vmem:[%s990 + $0x8] sm:$0xf]
          %v994 = vld [vmem:[%s990 + $0xc] sm:$0xf]
          %v995 = vld [vmem:[%s804 + $0xd] sm:$0x1]
          %v996 = vlaneseq
          %v997 = vshrl.u32 %v996, 7
          %v998 = vsub.s32 0, %v997
          %v999 = vrot.slane %v995, %v998
          %v1004 = vunpack.c.l.b16 %v991
          %v1005 = vunpack.c.l.b16 %v992
          %v1006 = vunpack.c.l.b16 %v993
          %v1007 = vunpack.c.l.b16 %v994
          %v1008 = vpack.c.b16 %v1005, %v1004
          %v1009 = vpack.c.b16 %v1007, %v1006
          %1012 = vmatprep.subr.bf16.mxu0 0
          %1013 = vmatpush1.bf16.msra.mxu0 %v1008
          %1014 = vmatprep.subr.bf16.mxu0 0
          %1015 = vmatpush1.bf16.msra.mxu0 %v1009
          %1016 = vmatprep.subr.bf16.mxu0 0
          %1017 = vmatpush1.bf16.msra.mxu0 0
          %1018 = vmatprep.subr.bf16.mxu0 0
          %1019 = vmatpush1.bf16.msra.mxu0 0
          %1020 = vmatprep.subr.bf16.mxu0 0
          %1021 = vmatpush1.bf16.msra.mxu0 0
          %1022 = vmatprep.subr.bf16.mxu0 0
          %1023 = vmatpush1.bf16.msra.mxu0 0
          %1024 = vmatprep.subr.bf16.mxu0 0
          %1025 = vmatpush1.bf16.msra.mxu0 0
          %1026 = vmatprep.subr.bf16.mxu0 0
          %1027 = vmatpush1.bf16.msra.mxu0 0
          %1028 = vmatprep.subr.bf16.mxu0 0
          %1029 = vmatpush1.bf16.msra.mxu0 0
          %1030 = vmatprep.subr.bf16.mxu0 0
          %1031 = vmatpush1.bf16.msra.mxu0 0
          %1032 = vmatprep.subr.bf16.mxu0 0
          %1033 = vmatpush1.bf16.msra.mxu0 0
          %1034 = vmatprep.subr.bf16.mxu0 0
          %1035 = vmatpush1.bf16.msra.mxu0 0
          %1036 = vmatprep.subr.bf16.mxu0 0
          %1037 = vmatpush1.bf16.msra.mxu0 0
          %1038 = vmatprep.subr.bf16.mxu0 0
          %1039 = vmatpush1.bf16.msra.mxu0 0
          %1040 = vmatprep.subr.bf16.mxu0 0
          %1041 = vmatpush1.bf16.msra.mxu0 0
          %1042 = vmatprep.subr.bf16.mxu0 0
          %1043 = vmatpush1.bf16.msra.mxu0 0
          %1044 = vmatprep.mubr.bf16.mxu0 0
          %1045 = vmatmul.mubr.bf16.gmra.mrb[0].mxu0 %v878
          %v1046 = vpop.f32.mrb[0].mxu0
          %v1047 = vadd.f32 %v999, %v1046
          %v1048 = vpop.f32.mrb[0].mxu0
          %v1049 = vpop.f32.mrb[0].mxu0
          %v1050 = vadd.f32 %v999, %v1049
          %v1051 = vpop.f32.mrb[0].mxu0
          %1052 = vdwg.mxu0
          %vm1053 = vcmask 130048
          %v1055 = vsel %vm1053, %v915, 0
          %v1058 = vsel %vm1053, %v918, 0
          %v1061 = vsel %vm1053, %v981, 0
          %v1064 = vsel %vm1053, %v984, 0
          %1066 = vmatprep.subr.mxu0 0.0
          %1067 = vmatpush1.xpose.msra.mxu0 %v1061
          %1068 = vmatprep.subr.mxu0 0.0
          %1069 = vmatpush1.xpose.msra.mxu0 %v1064
          %1070 = vmatprep.subr.mxu0 0.0
          %1071 = vmatpush1.xpose.msra.mxu0 0.0
          %1072 = vmatprep.subr.mxu0 0.0
          %1073 = vmatpush1.xpose.msra.mxu0 0.0
          %1074 = vmatprep.subr.mxu0 0.0
          %1075 = vmatpush1.xpose.msra.mxu0 0.0
          %1076 = vmatprep.subr.mxu0 0.0
          %1077 = vmatpush1.xpose.msra.mxu0 0.0
          %1078 = vmatprep.subr.mxu0 0.0
          %1079 = vmatpush1.xpose.msra.mxu0 0.0
          %1080 = vmatprep.subr.mxu0 0.0
          %1081 = vmatpush1.xpose.msra.mxu0 0.0
          %1082 = vmatprep.subr.mxu0 0.0
          %1083 = vmatpush1.xpose.msra.mxu0 0.0
          %1084 = vmatprep.subr.mxu0 0.0
          %1085 = vmatpush1.xpose.msra.mxu0 0.0
          %1086 = vmatprep.subr.mxu0 0.0
          %1087 = vmatpush1.xpose.msra.mxu0 0.0
          %1088 = vmatprep.subr.mxu0 0.0
          %1089 = vmatpush1.xpose.msra.mxu0 0.0
          %1090 = vmatprep.subr.mxu0 0.0
          %1091 = vmatpush1.xpose.msra.mxu0 0.0
          %1092 = vmatprep.subr.mxu0 0.0
          %1093 = vmatpush1.xpose.msra.mxu0 0.0
          %1094 = vmatprep.subr.mxu0 0.0
          %1095 = vmatpush1.xpose.msra.mxu0 0.0
          %1096 = vmatprep.subr.mxu0 0.0
          %1097 = vmatpush1.xpose.msra.mxu0 0.0
          %1098 = vmatprep.subr.mxu0 0.0
          %1099 = vmatpush1.xpose.msra.mxu0 0.0
          %1100 = vmatprep.subr.mxu0 0.0
          %1101 = vmatpush1.xpose.msra.mxu0 0.0
          %1102 = vmatprep.subr.mxu0 0.0
          %1103 = vmatpush1.xpose.msra.mxu0 0.0
          %1104 = vmatprep.subr.mxu0 0.0
          %1105 = vmatpush1.xpose.msra.mxu0 0.0
          %1106 = vmatprep.subr.mxu0 0.0
          %1107 = vmatpush1.xpose.msra.mxu0 0.0
          %1108 = vmatprep.subr.mxu0 0.0
          %1109 = vmatpush1.xpose.msra.mxu0 0.0
          %1110 = vmatprep.subr.mxu0 0.0
          %1111 = vmatpush1.xpose.msra.mxu0 0.0
          %1112 = vmatprep.subr.mxu0 0.0
          %1113 = vmatpush1.xpose.msra.mxu0 0.0
          %1114 = vmatprep.subr.mxu0 0.0
          %1115 = vmatpush1.xpose.msra.mxu0 0.0
          %1116 = vmatprep.subr.mxu0 0.0
          %1117 = vmatpush1.xpose.msra.mxu0 0.0
          %1118 = vmatprep.subr.mxu0 0.0
          %1119 = vmatpush1.xpose.msra.mxu0 0.0
          %1120 = vmatprep.subr.mxu0 0.0
          %1121 = vmatpush1.xpose.msra.mxu0 0.0
          %1122 = vmatprep.subr.mxu0 0.0
          %1123 = vmatpush1.xpose.msra.mxu0 0.0
          %1124 = vmatprep.subr.mxu0 0.0
          %1125 = vmatpush1.xpose.msra.mxu0 0.0
          %1126 = vmatprep.subr.mxu0 0.0
          %1127 = vmatpush1.xpose.msra.mxu0 0.0
          %1128 = vmatprep.subr.mxu0 0.0
          %1129 = vmatpush1.xpose.msra.mxu0 0.0
          %1130 = vmatprep.mubr.f32.mxu0 0.0
          %1131 = vmatmul.mubr.f32.gmra.mrb[0].mxu0 %v1055
          %v1132 = vpop.f32.mrb[0].mxu0
          %v1133 = vadd.f32 0.0, %v1132
          %v1134 = vpop.f32.mrb[0].mxu0
          %1135 = vmatprep.mubr.f32.mxu0 0.0
          %1136 = vmatmul.mubr.f32.gmra.mrb[0].mxu0 %v1058
          %v1137 = vpop.f32.mrb[0].mxu0
          %v1138 = vadd.f32 0.0, %v1137
          %v1139 = vpop.f32.mrb[0].mxu0
          %1140 = vdwg.mxu0
          %vm1141 = vcmask 72704
          %v1142 = vsel %vm1141, %v1133, -inf
          %1143 = vmax.xlane.f32.xlu0 %v1142
          %v1144 = vpop.xlane.xlu0 %1143
          %vm1145 = vcmask 65536
          %v1146 = vsel %vm1145, %v1138, -inf
          %1147 = vmax.xlane.f32.xlu0 %v1146
          %v1148 = vpop.xlane.xlu0 %1147
          %v1149 = vsub.f32 %v1133, %v1144
          %v1150 = vsub.f32 %v1138, %v1148
          %v1151 = vmul.f32 %v1149, 1.442695
          %v1152 = vpow.pop %v1151
          %v1153 = vmul.f32 %v1150, 1.442695
          %v1154 = vpow.pop %v1153
          %v1155 = vsel %vm1141, %v1152, 0.0
          %1156 = vadd.xlane.f32.xlu0 %v1155
          %v1157 = vpop.xlane.xlu0 %1156
          %v1158 = vsel %vm1145, %v1154, 0.0
          %1159 = vadd.xlane.f32.xlu0 %v1158
          %v1160 = vpop.xlane.xlu0 %1159
          %v1161 = vrcp.pop %v1157
          %v1162 = vrcp.pop %v1160
          %v1163 = vmul.f32 %v1152, %v1161
          %v1164 = vmul.f32 %v1154, %v1162
          %v1166 = vsel %vm1141, %v1163, 0
          %v1169 = vsel %vm1141, %v1164, 0
          %vm1171 = vcmask 1040384
          %v1173 = vsel %vm1171, %v1050, 0
          %1175 = vmatprep.subr.mxu0 0.0
          %1176 = vmatpush1.msra.mxu0 %v1047
          %1177 = vmatprep.subr.mxu0 0.0
          %1178 = vmatpush1.msra.mxu0 %v1173
          %1179 = vmatprep.subr.mxu0 0.0
          %1180 = vmatpush1.msra.mxu0 0.0
          %1181 = vmatprep.subr.mxu0 0.0
          %1182 = vmatpush1.msra.mxu0 0.0
          %1183 = vmatprep.subr.mxu0 0.0
          %1184 = vmatpush1.msra.mxu0 0.0
          %1185 = vmatprep.subr.mxu0 0.0
          %1186 = vmatpush1.msra.mxu0 0.0
          %1187 = vmatprep.subr.mxu0 0.0
          %1188 = vmatpush1.msra.mxu0 0.0
          %1189 = vmatprep.subr.mxu0 0.0
          %1190 = vmatpush1.msra.mxu0 0.0
          %1191 = vmatprep.subr.mxu0 0.0
          %1192 = vmatpush1.msra.mxu0 0.0
          %1193 = vmatprep.subr.mxu0 0.0
          %1194 = vmatpush1.msra.mxu0 0.0
          %1195 = vmatprep.subr.mxu0 0.0
          %1196 = vmatpush1.msra.mxu0 0.0
          %1197 = vmatprep.subr.mxu0 0.0
          %1198 = vmatpush1.msra.mxu0 0.0
          %1199 = vmatprep.subr.mxu0 0.0
          %1200 = vmatpush1.msra.mxu0 0.0
          %1201 = vmatprep.subr.mxu0 0.0
          %1202 = vmatpush1.msra.mxu0 0.0
          %1203 = vmatprep.subr.mxu0 0.0
          %1204 = vmatpush1.msra.mxu0 0.0
          %1205 = vmatprep.subr.mxu0 0.0
          %1206 = vmatpush1.msra.mxu0 0.0
          %1207 = vmatprep.subr.mxu0 0.0
          %1208 = vmatpush1.msra.mxu0 0.0
          %1209 = vmatprep.subr.mxu0 0.0
          %1210 = vmatpush1.msra.mxu0 0.0
          %1211 = vmatprep.subr.mxu0 0.0
          %1212 = vmatpush1.msra.mxu0 0.0
          %1213 = vmatprep.subr.mxu0 0.0
          %1214 = vmatpush1.msra.mxu0 0.0
          %1215 = vmatprep.subr.mxu0 0.0
          %1216 = vmatpush1.msra.mxu0 0.0
          %1217 = vmatprep.subr.mxu0 0.0
          %1218 = vmatpush1.msra.mxu0 0.0
          %1219 = vmatprep.subr.mxu0 0.0
          %1220 = vmatpush1.msra.mxu0 0.0
          %1221 = vmatprep.subr.mxu0 0.0
          %1222 = vmatpush1.msra.mxu0 0.0
          %1223 = vmatprep.subr.mxu0 0.0
          %1224 = vmatpush1.msra.mxu0 0.0
          %1225 = vmatprep.subr.mxu0 0.0
          %1226 = vmatpush1.msra.mxu0 0.0
          %1227 = vmatprep.subr.mxu0 0.0
          %1228 = vmatpush1.msra.mxu0 0.0
          %1229 = vmatprep.subr.mxu0 0.0
          %1230 = vmatpush1.msra.mxu0 0.0
          %1231 = vmatprep.subr.mxu0 0.0
          %1232 = vmatpush1.msra.mxu0 0.0
          %1233 = vmatprep.subr.mxu0 0.0
          %1234 = vmatpush1.msra.mxu0 0.0
          %1235 = vmatprep.subr.mxu0 0.0
          %1236 = vmatpush1.msra.mxu0 0.0
          %1237 = vmatprep.subr.mxu0 0.0
          %1238 = vmatpush1.msra.mxu0 0.0
          %1239 = vmatprep.mubr.f32.mxu0 0.0
          %1240 = vmatmul.mubr.f32.gmra.mrb[0].mxu0 %v1166
          %v1241 = vpop.f32.mrb[0].mxu0
          %v1242 = vadd.f32 0.0, %v1241
          %v1243 = vpop.f32.mrb[0].mxu0
          %1244 = vmatprep.mubr.f32.mxu0 0.0
          %1245 = vmatmul.mubr.f32.gmra.mrb[0].mxu0 %v1169
          %v1246 = vpop.f32.mrb[0].mxu0
          %v1247 = vadd.f32 0.0, %v1246
          %v1248 = vpop.f32.mrb[0].mxu0
          %1249 = vdwg.mxu0
          %v1250 = vpack.c.bf16 %v1247, %v1242
          %s1251 = smul.u32 %s796, 2
          %s1252 = smul.u32 %s1251, 2
          %s1253 = smul.addr %s1252, 4
          %s1254 = scalar_lea.vmem %s4, %s1253
          %v1255 = vld [vmem:[%s1254] sm:$0xf]
          %v1256 = vld [vmem:[%s1254 + $0x4] sm:$0xf]
          %v1259 = vunpack.c.l.b16 %v1255
          %v1260 = vunpack.c.l.b16 %v1256
          %v1261 = vpack.c.b16 %v1260, %v1259
          %v1264 = vsel %vm1053, %v1250, 0
          %1266 = vmatprep.subr.bf16.mxu0 0
          %1267 = vmatpush1.bf16.msra.mxu0 %v1261
          %1268 = vmatprep.subr.bf16.mxu0 0
          %1269 = vmatpush1.bf16.msra.mxu0 0
          %1270 = vmatprep.subr.bf16.mxu0 0
          %1271 = vmatpush1.bf16.msra.mxu0 0
          %1272 = vmatprep.subr.bf16.mxu0 0
          %1273 = vmatpush1.bf16.msra.mxu0 0
          %1274 = vmatprep.subr.bf16.mxu0 0
          %1275 = vmatpush1.bf16.msra.mxu0 0
          %1276 = vmatprep.subr.bf16.mxu0 0
          %1277 = vmatpush1.bf16.msra.mxu0 0
          %1278 = vmatprep.subr.bf16.mxu0 0
          %1279 = vmatpush1.bf16.msra.mxu0 0
          %1280 = vmatprep.subr.bf16.mxu0 0
          %1281 = vmatpush1.bf16.msra.mxu0 0
          %1282 = vmatprep.subr.bf16.mxu0 0
          %1283 = vmatpush1.bf16.msra.mxu0 0
          %1284 = vmatprep.subr.bf16.mxu0 0
          %1285 = vmatpush1.bf16.msra.mxu0 0
          %1286 = vmatprep.subr.bf16.mxu0 0
          %1287 = vmatpush1.bf16.msra.mxu0 0
          %1288 = vmatprep.subr.bf16.mxu0 0
          %1289 = vmatpush1.bf16.msra.mxu0 0
          %1290 = vmatprep.subr.bf16.mxu0 0
          %1291 = vmatpush1.bf16.msra.mxu0 0
          %1292 = vmatprep.subr.bf16.mxu0 0
          %1293 = vmatpush1.bf16.msra.mxu0 0
          %1294 = vmatprep.subr.bf16.mxu0 0
          %1295 = vmatpush1.bf16.msra.mxu0 0
          %1296 = vmatprep.subr.bf16.mxu0 0
          %1297 = vmatpush1.bf16.msra.mxu0 0
          %1298 = vmatprep.mubr.bf16.mxu0 0
          %1299 = vmatmul.mubr.bf16.gmra.mrb[0].mxu0 %v1264
          %v1300 = vpop.f32.mrb[0].mxu0
          %v1301 = vadd.f32 0.0, %v1300
          %v1302 = vpop.f32.mrb[0].mxu0
          %v1303 = vpop.f32.mrb[0].mxu0
          %v1304 = vadd.f32 0.0, %v1303
          %v1305 = vpop.f32.mrb[0].mxu0
          %1306 = vdwg.mxu0
          %v1307 = vadd.f32 %v851, %v1301
          %v1308 = vadd.f32 %v851, %v1304
          %s1309 = sadd.s32 %s1251, 1
          %s1310 = smul.u32 %s1309, 3
          %s1311 = smul.u32 %s1310, 4
          %s1312 = smul.addr %s1311, 4
          %s1313 = scalar_lea.vmem %s3, %s1312
          %v1314 = vld [vmem:[%s1313] sm:$0xf]
          %v1315 = vld [vmem:[%s1313 + $0x4] sm:$0xf]
          %v1316 = vld [vmem:[%s1313 + $0x8] sm:$0xf]
          %v1317 = vld [vmem:[%s1313 + $0xc] sm:$0xf]
          %v1318 = vld [vmem:[%s804 + $0xa] sm:$0x1]
          %v1319 = vlaneseq
          %v1320 = vshrl.u32 %v1319, 7
          %v1321 = vsub.s32 0, %v1320
          %v1322 = vrot.slane %v1318, %v1321
          %v1327 = vunpack.c.l.b16 %v1314
          %v1328 = vunpack.c.l.b16 %v1315
          %v1329 = vunpack.c.l.b16 %v1316
          %v1330 = vunpack.c.l.b16 %v1317
          %v1331 = vpack.c.b16 %v1328, %v1327
          %v1332 = vpack.c.b16 %v1330, %v1329
          %1335 = vmatprep.subr.bf16.mxu0 0
          %1336 = vmatpush1.bf16.msra.mxu0 %v1331
          %1337 = vmatprep.subr.bf16.mxu0 0
          %1338 = vmatpush1.bf16.msra.mxu0 %v1332
          %1339 = vmatprep.subr.bf16.mxu0 0
          %1340 = vmatpush1.bf16.msra.mxu0 0
          %1341 = vmatprep.subr.bf16.mxu0 0
          %1342 = vmatpush1.bf16.msra.mxu0 0
          %1343 = vmatprep.subr.bf16.mxu0 0
          %1344 = vmatpush1.bf16.msra.mxu0 0
          %1345 = vmatprep.subr.bf16.mxu0 0
          %1346 = vmatpush1.bf16.msra.mxu0 0
          %1347 = vmatprep.subr.bf16.mxu0 0
          %1348 = vmatpush1.bf16.msra.mxu0 0
          %1349 = vmatprep.subr.bf16.mxu0 0
          %1350 = vmatpush1.bf16.msra.mxu0 0
          %1351 = vmatprep.subr.bf16.mxu0 0
          %1352 = vmatpush1.bf16.msra.mxu0 0
          %1353 = vmatprep.subr.bf16.mxu0 0
          %1354 = vmatpush1.bf16.msra.mxu0 0
          %1355 = vmatprep.subr.bf16.mxu0 0
          %1356 = vmatpush1.bf16.msra.mxu0 0
          %1357 = vmatprep.subr.bf16.mxu0 0
          %1358 = vmatpush1.bf16.msra.mxu0 0
          %1359 = vmatprep.subr.bf16.mxu0 0
          %1360 = vmatpush1.bf16.msra.mxu0 0
          %1361 = vmatprep.subr.bf16.mxu0 0
          %1362 = vmatpush1.bf16.msra.mxu0 0
          %1363 = vmatprep.subr.bf16.mxu0 0
          %1364 = vmatpush1.bf16.msra.mxu0 0
          %1365 = vmatprep.subr.bf16.mxu0 0
          %1366 = vmatpush1.bf16.msra.mxu0 0
          %1367 = vmatprep.mubr.bf16.mxu0 0
          %1368 = vmatmul.mubr.bf16.gmra.mrb[0].mxu0 %v878
          %v1369 = vpop.f32.mrb[0].mxu0
          %v1370 = vadd.f32 %v1322, %v1369
          %v1371 = vpop.f32.mrb[0].mxu0
          %v1372 = vpop.f32.mrb[0].mxu0
          %v1373 = vadd.f32 %v1322, %v1372
          %v1374 = vpop.f32.mrb[0].mxu0
          %1375 = vdwg.mxu0
          %s1376 = sadd.s32 %s1310, 1
          %s1377 = smul.u32 %s1376, 4
          %s1378 = smul.addr %s1377, 4
          %s1379 = scalar_lea.vmem %s3, %s1378
          %v1380 = vld [vmem:[%s1379] sm:$0xf]
          %v1381 = vld [vmem:[%s1379 + $0x4] sm:$0xf]
          %v1382 = vld [vmem:[%s1379 + $0x8] sm:$0xf]
          %v1383 = vld [vmem:[%s1379 + $0xc] sm:$0xf]
          %v1384 = vld [vmem:[%s804 + $0xc] sm:$0x1]
          %v1385 = vlaneseq
          %v1386 = vshrl.u32 %v1385, 7
          %v1387 = vsub.s32 0, %v1386
          %v1388 = vrot.slane %v1384, %v1387
          %v1393 = vunpack.c.l.b16 %v1380
          %v1394 = vunpack.c.l.b16 %v1381
          %v1395 = vunpack.c.l.b16 %v1382
          %v1396 = vunpack.c.l.b16 %v1383
          %v1397 = vpack.c.b16 %v1394, %v1393
          %v1398 = vpack.c.b16 %v1396, %v1395
          %1401 = vmatprep.subr.bf16.mxu0 0
          %1402 = vmatpush1.bf16.msra.mxu0 %v1397
          %1403 = vmatprep.subr.bf16.mxu0 0
          %1404 = vmatpush1.bf16.msra.mxu0 %v1398
          %1405 = vmatprep.subr.bf16.mxu0 0
          %1406 = vmatpush1.bf16.msra.mxu0 0
          %1407 = vmatprep.subr.bf16.mxu0 0
          %1408 = vmatpush1.bf16.msra.mxu0 0
          %1409 = vmatprep.subr.bf16.mxu0 0
          %1410 = vmatpush1.bf16.msra.mxu0 0
          %1411 = vmatprep.subr.bf16.mxu0 0
          %1412 = vmatpush1.bf16.msra.mxu0 0
          %1413 = vmatprep.subr.bf16.mxu0 0
          %1414 = vmatpush1.bf16.msra.mxu0 0
          %1415 = vmatprep.subr.bf16.mxu0 0
          %1416 = vmatpush1.bf16.msra.mxu0 0
          %1417 = vmatprep.subr.bf16.mxu0 0
          %1418 = vmatpush1.bf16.msra.mxu0 0
          %1419 = vmatprep.subr.bf16.mxu0 0
          %1420 = vmatpush1.bf16.msra.mxu0 0
          %1421 = vmatprep.subr.bf16.mxu0 0
          %1422 = vmatpush1.bf16.msra.mxu0 0
          %1423 = vmatprep.subr.bf16.mxu0 0
          %1424 = vmatpush1.bf16.msra.mxu0 0
          %1425 = vmatprep.subr.bf16.mxu0 0
          %1426 = vmatpush1.bf16.msra.mxu0 0
          %1427 = vmatprep.subr.bf16.mxu0 0
          %1428 = vmatpush1.bf16.msra.mxu0 0
          %1429 = vmatprep.subr.bf16.mxu0 0
          %1430 = vmatpush1.bf16.msra.mxu0 0
          %1431 = vmatprep.subr.bf16.mxu0 0
          %1432 = vmatpush1.bf16.msra.mxu0 0
          %1433 = vmatprep.mubr.bf16.mxu0 0
          %1434 = vmatmul.mubr.bf16.gmra.mrb[0].mxu0 %v878
          %v1435 = vpop.f32.mrb[0].mxu0
          %v1436 = vadd.f32 %v1388, %v1435
          %v1437 = vpop.f32.mrb[0].mxu0
          %v1438 = vpop.f32.mrb[0].mxu0
          %v1439 = vadd.f32 %v1388, %v1438
          %v1440 = vpop.f32.mrb[0].mxu0
          %1441 = vdwg.mxu0
          %s1442 = sadd.s32 %s1310, 2
          %s1443 = smul.u32 %s1442, 4
          %s1444 = smul.addr %s1443, 4
          %s1445 = scalar_lea.vmem %s3, %s1444
          %v1446 = vld [vmem:[%s1445] sm:$0xf]
          %v1447 = vld [vmem:[%s1445 + $0x4] sm:$0xf]
          %v1448 = vld [vmem:[%s1445 + $0x8] sm:$0xf]
          %v1449 = vld [vmem:[%s1445 + $0xc] sm:$0xf]
          %v1450 = vld [vmem:[%s804 + $0xe] sm:$0x1]
          %v1451 = vlaneseq
          %v1452 = vshrl.u32 %v1451, 7
          %v1453 = vsub.s32 0, %v1452
          %v1454 = vrot.slane %v1450, %v1453
          %v1459 = vunpack.c.l.b16 %v1446
          %v1460 = vunpack.c.l.b16 %v1447
          %v1461 = vunpack.c.l.b16 %v1448
          %v1462 = vunpack.c.l.b16 %v1449
          %v1463 = vpack.c.b16 %v1460, %v1459
          %v1464 = vpack.c.b16 %v1462, %v1461
          %1467 = vmatprep.subr.bf16.mxu0 0
          %1468 = vmatpush1.bf16.msra.mxu0 %v1463
          %1469 = vmatprep.subr.bf16.mxu0 0
          %1470 = vmatpush1.bf16.msra.mxu0 %v1464
          %1471 = vmatprep.subr.bf16.mxu0 0
          %1472 = vmatpush1.bf16.msra.mxu0 0
          %1473 = vmatprep.subr.bf16.mxu0 0
          %1474 = vmatpush1.bf16.msra.mxu0 0
          %1475 = vmatprep.subr.bf16.mxu0 0
          %1476 = vmatpush1.bf16.msra.mxu0 0
          %1477 = vmatprep.subr.bf16.mxu0 0
          %1478 = vmatpush1.bf16.msra.mxu0 0
          %1479 = vmatprep.subr.bf16.mxu0 0
          %1480 = vmatpush1.bf16.msra.mxu0 0
          %1481 = vmatprep.subr.bf16.mxu0 0
          %1482 = vmatpush1.bf16.msra.mxu0 0
          %1483 = vmatprep.subr.bf16.mxu0 0
          %1484 = vmatpush1.bf16.msra.mxu0 0
          %1485 = vmatprep.subr.bf16.mxu0 0
          %1486 = vmatpush1.bf16.msra.mxu0 0
          %1487 = vmatprep.subr.bf16.mxu0 0
          %1488 = vmatpush1.bf16.msra.mxu0 0
          %1489 = vmatprep.subr.bf16.mxu0 0
          %1490 = vmatpush1.bf16.msra.mxu0 0
          %1491 = vmatprep.subr.bf16.mxu0 0
          %1492 = vmatpush1.bf16.msra.mxu0 0
          %1493 = vmatprep.subr.bf16.mxu0 0
          %1494 = vmatpush1.bf16.msra.mxu0 0
          %1495 = vmatprep.subr.bf16.mxu0 0
          %1496 = vmatpush1.bf16.msra.mxu0 0
          %1497 = vmatprep.subr.bf16.mxu0 0
          %1498 = vmatpush1.bf16.msra.mxu0 0
          %1499 = vmatprep.mubr.bf16.mxu0 0
          %1500 = vmatmul.mubr.bf16.gmra.mrb[0].mxu0 %v878
          %v1501 = vpop.f32.mrb[0].mxu0
          %v1502 = vadd.f32 %v1454, %v1501
          %v1503 = vpop.f32.mrb[0].mxu0
          %v1504 = vpop.f32.mrb[0].mxu0
          %v1505 = vadd.f32 %v1454, %v1504
          %v1506 = vpop.f32.mrb[0].mxu0
          %1507 = vdwg.mxu0
          %v1509 = vsel %vm1053, %v1370, 0
          %v1512 = vsel %vm1053, %v1373, 0
          %v1515 = vsel %vm1053, %v1436, 0
          %v1518 = vsel %vm1053, %v1439, 0
          %1520 = vmatprep.subr.mxu0 0.0
          %1521 = vmatpush1.xpose.msra.mxu0 %v1515
          %1522 = vmatprep.subr.mxu0 0.0
          %1523 = vmatpush1.xpose.msra.mxu0 %v1518
          %1524 = vmatprep.subr.mxu0 0.0
          %1525 = vmatpush1.xpose.msra.mxu0 0.0
          %1526 = vmatprep.subr.mxu0 0.0
          %1527 = vmatpush1.xpose.msra.mxu0 0.0
          %1528 = vmatprep.subr.mxu0 0.0
          %1529 = vmatpush1.xpose.msra.mxu0 0.0
          %1530 = vmatprep.subr.mxu0 0.0
          %1531 = vmatpush1.xpose.msra.mxu0 0.0
          %1532 = vmatprep.subr.mxu0 0.0
          %1533 = vmatpush1.xpose.msra.mxu0 0.0
          %1534 = vmatprep.subr.mxu0 0.0
          %1535 = vmatpush1.xpose.msra.mxu0 0.0
          %1536 = vmatprep.subr.mxu0 0.0
          %1537 = vmatpush1.xpose.msra.mxu0 0.0
          %1538 = vmatprep.subr.mxu0 0.0
          %1539 = vmatpush1.xpose.msra.mxu0 0.0
          %1540 = vmatprep.subr.mxu0 0.0
          %1541 = vmatpush1.xpose.msra.mxu0 0.0
          %1542 = vmatprep.subr.mxu0 0.0
          %1543 = vmatpush1.xpose.msra.mxu0 0.0
          %1544 = vmatprep.subr.mxu0 0.0
          %1545 = vmatpush1.xpose.msra.mxu0 0.0
          %1546 = vmatprep.subr.mxu0 0.0
          %1547 = vmatpush1.xpose.msra.mxu0 0.0
          %1548 = vmatprep.subr.mxu0 0.0
          %1549 = vmatpush1.xpose.msra.mxu0 0.0
          %1550 = vmatprep.subr.mxu0 0.0
          %1551 = vmatpush1.xpose.msra.mxu0 0.0
          %1552 = vmatprep.subr.mxu0 0.0
          %1553 = vmatpush1.xpose.msra.mxu0 0.0
          %1554 = vmatprep.subr.mxu0 0.0
          %1555 = vmatpush1.xpose.msra.mxu0 0.0
          %1556 = vmatprep.subr.mxu0 0.0
          %1557 = vmatpush1.xpose.msra.mxu0 0.0
          %1558 = vmatprep.subr.mxu0 0.0
          %1559 = vmatpush1.xpose.msra.mxu0 0.0
          %1560 = vmatprep.subr.mxu0 0.0
          %1561 = vmatpush1.xpose.msra.mxu0 0.0
          %1562 = vmatprep.subr.mxu0 0.0
          %1563 = vmatpush1.xpose.msra.mxu0 0.0
          %1564 = vmatprep.subr.mxu0 0.0
          %1565 = vmatpush1.xpose.msra.mxu0 0.0
          %1566 = vmatprep.subr.mxu0 0.0
          %1567 = vmatpush1.xpose.msra.mxu0 0.0
          %1568 = vmatprep.subr.mxu0 0.0
          %1569 = vmatpush1.xpose.msra.mxu0 0.0
          %1570 = vmatprep.subr.mxu0 0.0
          %1571 = vmatpush1.xpose.msra.mxu0 0.0
          %1572 = vmatprep.subr.mxu0 0.0
          %1573 = vmatpush1.xpose.msra.mxu0 0.0
          %1574 = vmatprep.subr.mxu0 0.0
          %1575 = vmatpush1.xpose.msra.mxu0 0.0
          %1576 = vmatprep.subr.mxu0 0.0
          %1577 = vmatpush1.xpose.msra.mxu0 0.0
          %1578 = vmatprep.subr.mxu0 0.0
          %1579 = vmatpush1.xpose.msra.mxu0 0.0
          %1580 = vmatprep.subr.mxu0 0.0
          %1581 = vmatpush1.xpose.msra.mxu0 0.0
          %1582 = vmatprep.subr.mxu0 0.0
          %1583 = vmatpush1.xpose.msra.mxu0 0.0
          %1584 = vmatprep.mubr.f32.mxu0 0.0
          %1585 = vmatmul.mubr.f32.gmra.mrb[0].mxu0 %v1509
          %v1586 = vpop.f32.mrb[0].mxu0
          %v1587 = vadd.f32 0.0, %v1586
          %v1588 = vpop.f32.mrb[0].mxu0
          %1589 = vmatprep.mubr.f32.mxu0 0.0
          %1590 = vmatmul.mubr.f32.gmra.mrb[0].mxu0 %v1512
          %v1591 = vpop.f32.mrb[0].mxu0
          %v1592 = vadd.f32 0.0, %v1591
          %v1593 = vpop.f32.mrb[0].mxu0
          %1594 = vdwg.mxu0
          %v1595 = vsel %vm1141, %v1587, -inf
          %1596 = vmax.xlane.f32.xlu0 %v1595
          %v1597 = vpop.xlane.xlu0 %1596
          %v1598 = vsel %vm1145, %v1592, -inf
          %1599 = vmax.xlane.f32.xlu0 %v1598
          %v1600 = vpop.xlane.xlu0 %1599
          %v1601 = vsub.f32 %v1587, %v1597
          %v1602 = vsub.f32 %v1592, %v1600
          %v1603 = vmul.f32 %v1601, 1.442695
          %v1604 = vpow.pop %v1603
          %v1605 = vmul.f32 %v1602, 1.442695
          %v1606 = vpow.pop %v1605
          %v1607 = vsel %vm1141, %v1604, 0.0
          %1608 = vadd.xlane.f32.xlu0 %v1607
          %v1609 = vpop.xlane.xlu0 %1608
          %v1610 = vsel %vm1145, %v1606, 0.0
          %1611 = vadd.xlane.f32.xlu0 %v1610
          %v1612 = vpop.xlane.xlu0 %1611
          %v1613 = vrcp.pop %v1609
          %v1614 = vrcp.pop %v1612
          %v1615 = vmul.f32 %v1604, %v1613
          %v1616 = vmul.f32 %v1606, %v1614
          %v1618 = vsel %vm1141, %v1615, 0
          %v1621 = vsel %vm1141, %v1616, 0
          %v1624 = vsel %vm1171, %v1505, 0
          %1626 = vmatprep.subr.mxu0 0.0
          %1627 = vmatpush1.msra.mxu0 %v1502
          %1628 = vmatprep.subr.mxu0 0.0
          %1629 = vmatpush1.msra.mxu0 %v1624
          %1630 = vmatprep.subr.mxu0 0.0
          %1631 = vmatpush1.msra.mxu0 0.0
          %1632 = vmatprep.subr.mxu0 0.0
          %1633 = vmatpush1.msra.mxu0 0.0
          %1634 = vmatprep.subr.mxu0 0.0
          %1635 = vmatpush1.msra.mxu0 0.0
          %1636 = vmatprep.subr.mxu0 0.0
          %1637 = vmatpush1.msra.mxu0 0.0
          %1638 = vmatprep.subr.mxu0 0.0
          %1639 = vmatpush1.msra.mxu0 0.0
          %1640 = vmatprep.subr.mxu0 0.0
          %1641 = vmatpush1.msra.mxu0 0.0
          %1642 = vmatprep.subr.mxu0 0.0
          %1643 = vmatpush1.msra.mxu0 0.0
          %1644 = vmatprep.subr.mxu0 0.0
          %1645 = vmatpush1.msra.mxu0 0.0
          %1646 = vmatprep.subr.mxu0 0.0
          %1647 = vmatpush1.msra.mxu0 0.0
          %1648 = vmatprep.subr.mxu0 0.0
          %1649 = vmatpush1.msra.mxu0 0.0
          %1650 = vmatprep.subr.mxu0 0.0
          %1651 = vmatpush1.msra.mxu0 0.0
          %1652 = vmatprep.subr.mxu0 0.0
          %1653 = vmatpush1.msra.mxu0 0.0
          %1654 = vmatprep.subr.mxu0 0.0
          %1655 = vmatpush1.msra.mxu0 0.0
          %1656 = vmatprep.subr.mxu0 0.0
          %1657 = vmatpush1.msra.mxu0 0.0
          %1658 = vmatprep.subr.mxu0 0.0
          %1659 = vmatpush1.msra.mxu0 0.0
          %1660 = vmatprep.subr.mxu0 0.0
          %1661 = vmatpush1.msra.mxu0 0.0
          %1662 = vmatprep.subr.mxu0 0.0
          %1663 = vmatpush1.msra.mxu0 0.0
          %1664 = vmatprep.subr.mxu0 0.0
          %1665 = vmatpush1.msra.mxu0 0.0
          %1666 = vmatprep.subr.mxu0 0.0
          %1667 = vmatpush1.msra.mxu0 0.0
          %1668 = vmatprep.subr.mxu0 0.0
          %1669 = vmatpush1.msra.mxu0 0.0
          %1670 = vmatprep.subr.mxu0 0.0
          %1671 = vmatpush1.msra.mxu0 0.0
          %1672 = vmatprep.subr.mxu0 0.0
          %1673 = vmatpush1.msra.mxu0 0.0
          %1674 = vmatprep.subr.mxu0 0.0
          %1675 = vmatpush1.msra.mxu0 0.0
          %1676 = vmatprep.subr.mxu0 0.0
          %1677 = vmatpush1.msra.mxu0 0.0
          %1678 = vmatprep.subr.mxu0 0.0
          %1679 = vmatpush1.msra.mxu0 0.0
          %1680 = vmatprep.subr.mxu0 0.0
          %1681 = vmatpush1.msra.mxu0 0.0
          %1682 = vmatprep.subr.mxu0 0.0
          %1683 = vmatpush1.msra.mxu0 0.0
          %1684 = vmatprep.subr.mxu0 0.0
          %1685 = vmatpush1.msra.mxu0 0.0
          %1686 = vmatprep.subr.mxu0 0.0
          %1687 = vmatpush1.msra.mxu0 0.0
          %1688 = vmatprep.subr.mxu0 0.0
          %1689 = vmatpush1.msra.mxu0 0.0
          %1690 = vmatprep.mubr.f32.mxu0 0.0
          %1691 = vmatmul.mubr.f32.gmra.mrb[0].mxu0 %v1618
          %v1692 = vpop.f32.mrb[0].mxu0
          %v1693 = vadd.f32 0.0, %v1692
          %v1694 = vpop.f32.mrb[0].mxu0
          %1695 = vmatprep.mubr.f32.mxu0 0.0
          %1696 = vmatmul.mubr.f32.gmra.mrb[0].mxu0 %v1621
          %v1697 = vpop.f32.mrb[0].mxu0
          %v1698 = vadd.f32 0.0, %v1697
          %v1699 = vpop.f32.mrb[0].mxu0
          %1700 = vdwg.mxu0
          %v1701 = vpack.c.bf16 %v1698, %v1693
          %s1702 = smul.u32 %s1309, 2
          %s1703 = smul.addr %s1702, 4
          %s1704 = scalar_lea.vmem %s4, %s1703
          %v1705 = vld [vmem:[%s1704] sm:$0xf]
          %v1706 = vld [vmem:[%s1704 + $0x4] sm:$0xf]
          %v1709 = vunpack.c.l.b16 %v1705
          %v1710 = vunpack.c.l.b16 %v1706
          %v1711 = vpack.c.b16 %v1710, %v1709
          %v1714 = vsel %vm1053, %v1701, 0
          %1716 = vmatprep.subr.bf16.mxu0 0
          %1717 = vmatpush1.bf16.msra.mxu0 %v1711
          %1718 = vmatprep.subr.bf16.mxu0 0
          %1719 = vmatpush1.bf16.msra.mxu0 0
          %1720 = vmatprep.subr.bf16.mxu0 0
          %1721 = vmatpush1.bf16.msra.mxu0 0
          %1722 = vmatprep.subr.bf16.mxu0 0
          %1723 = vmatpush1.bf16.msra.mxu0 0
          %1724 = vmatprep.subr.bf16.mxu0 0
          %1725 = vmatpush1.bf16.msra.mxu0 0
          %1726 = vmatprep.subr.bf16.mxu0 0
          %1727 = vmatpush1.bf16.msra.mxu0 0
          %1728 = vmatprep.subr.bf16.mxu0 0
          %1729 = vmatpush1.bf16.msra.mxu0 0
          %1730 = vmatprep.subr.bf16.mxu0 0
          %1731 = vmatpush1.bf16.msra.mxu0 0
          %1732 = vmatprep.subr.bf16.mxu0 0
          %1733 = vmatpush1.bf16.msra.mxu0 0
          %1734 = vmatprep.subr.bf16.mxu0 0
          %1735 = vmatpush1.bf16.msra.mxu0 0
          %1736 = vmatprep.subr.bf16.mxu0 0
          %1737 = vmatpush1.bf16.msra.mxu0 0
          %1738 = vmatprep.subr.bf16.mxu0 0
          %1739 = vmatpush1.bf16.msra.mxu0 0
          %1740 = vmatprep.subr.bf16.mxu0 0
          %1741 = vmatpush1.bf16.msra.mxu0 0
          %1742 = vmatprep.subr.bf16.mxu0 0
          %1743 = vmatpush1.bf16.msra.mxu0 0
          %1744 = vmatprep.subr.bf16.mxu0 0
          %1745 = vmatpush1.bf16.msra.mxu0 0
          %1746 = vmatprep.subr.bf16.mxu0 0
          %1747 = vmatpush1.bf16.msra.mxu0 0
          %1748 = vmatprep.mubr.bf16.mxu0 0
          %1749 = vmatmul.mubr.bf16.gmra.mrb[0].mxu0 %v1714
          %v1750 = vpop.f32.mrb[0].mxu0
          %v1751 = vadd.f32 0.0, %v1750
          %v1752 = vpop.f32.mrb[0].mxu0
          %v1753 = vpop.f32.mrb[0].mxu0
          %v1754 = vadd.f32 0.0, %v1753
          %v1755 = vpop.f32.mrb[0].mxu0
          %1756 = vdwg.mxu0
          %v1757 = vadd.f32 %v1307, %v1751
          %v1758 = vadd.f32 %v1308, %v1754
          %v1759 = vld [vmem:[%s804 + $0x3] sm:$0x1]
          %v1760 = vlaneseq
          %v1761 = vshrl.u32 %v1760, 7
          %v1762 = vsub.s32 0, %v1761
          %v1763 = vrot.slane %v1759, %v1762
          %v1764 = vmul.f32 %v1757, %v1763
          %v1765 = vmul.f32 %v1758, %v1763
          %v1766 = vadd.f32 %v801, %v1764
          %v1767 = vadd.f32 %v802, %v1765
          %v1768 = vld [vmem:[%s804 + $0x4] sm:$0x1]
          %v1769 = vld [vmem:[%s804 + $0x5] sm:$0x1]
          %v1770 = vsel %vm791, %v1766, 0.0
          %1771 = vadd.xlane.f32.xlu0 %v1770
          %v1772 = vpop.xlane.xlu0 %1771
          %v1773 = vsel %vm793, %v1767, 0.0
          %1774 = vadd.xlane.f32.xlu0 %v1773
          %v1775 = vpop.xlane.xlu0 %1774
          %v1776 = vmul.f32 %v1772, %v813
          %v1777 = vmul.f32 %v1775, %v813
          %v1778 = vsub.f32 %v1766, %v1776
          %v1779 = vsub.f32 %v1767, %v1777
          %v1780 = vmul.f32 %v1778, %v1778
          %v1781 = vmul.f32 %v1779, %v1779
          %v1782 = vsel %vm791, %v1780, 0.0
          %1783 = vadd.xlane.f32.xlu0 %v1782
          %v1784 = vpop.xlane.xlu0 %1783
          %v1785 = vsel %vm793, %v1781, 0.0
          %1786 = vadd.xlane.f32.xlu0 %v1785
          %v1787 = vpop.xlane.xlu0 %1786
          %v1788 = vmul.f32 %v1784, %v813
          %v1789 = vmul.f32 %v1787, %v813
          %v1790 = vadd.f32 %v1788, 1e-06
          %v1791 = vadd.f32 %v1789, 1e-06
          %v1792 = vrsqrt.pop %v1790
          %v1793 = vrsqrt.pop %v1791
          %v1794 = vmul.f32 %v1778, %v1792
          %v1795 = vmul.f32 %v1779, %v1793
          %v1796 = vlaneseq
          %v1797 = vshrl.u32 %v1796, 7
          %v1798 = vsub.s32 0, %v1797
          %v1799 = vrot.slane %v1768, %v1798
          %v1800 = vmul.f32 %v1794, %v1799
          %v1801 = vmul.f32 %v1795, %v1799
          %v1802 = vlaneseq
          %v1803 = vshrl.u32 %v1802, 7
          %v1804 = vsub.s32 0, %v1803
          %v1805 = vrot.slane %v1769, %v1804
          %v1806 = vadd.f32 %v1800, %v1805
          %v1807 = vadd.f32 %v1801, %v1805
          %v1808 = vpack.c.bf16 %v1807, %v1806
          %s1809 = smul.u32 %s796, 4
          %s1810 = smul.addr %s1809, 4
          %s1811 = scalar_lea.vmem %s5, %s1810
          %v1812 = vld [vmem:[%s1811] sm:$0xf]
          %v1813 = vld [vmem:[%s1811 + $0x4] sm:$0xf]
          %v1814 = vld [vmem:[%s1811 + $0x8] sm:$0xf]
          %v1815 = vld [vmem:[%s1811 + $0xc] sm:$0xf]
          %v1816 = vld [vmem:[%s804 + $0x8] sm:$0x1]
          %v1817 = vlaneseq
          %v1818 = vshrl.u32 %v1817, 7
          %v1819 = vsub.s32 0, %v1818
          %v1820 = vrot.slane %v1816, %v1819
          %v1825 = vunpack.c.l.b16 %v1812
          %v1826 = vunpack.c.l.b16 %v1813
          %v1827 = vunpack.c.l.b16 %v1814
          %v1828 = vunpack.c.l.b16 %v1815
          %v1829 = vpack.c.b16 %v1826, %v1825
          %v1830 = vpack.c.b16 %v1828, %v1827
          %v1834 = vsel %vm791, %v1808, 0
          %1836 = vmatprep.subr.bf16.mxu0 0
          %1837 = vmatpush1.bf16.msra.mxu0 %v1829
          %1838 = vmatprep.subr.bf16.mxu0 0
          %1839 = vmatpush1.bf16.msra.mxu0 %v1830
          %1840 = vmatprep.subr.bf16.mxu0 0
          %1841 = vmatpush1.bf16.msra.mxu0 0
          %1842 = vmatprep.subr.bf16.mxu0 0
          %1843 = vmatpush1.bf16.msra.mxu0 0
          %1844 = vmatprep.subr.bf16.mxu0 0
          %1845 = vmatpush1.bf16.msra.mxu0 0
          %1846 = vmatprep.subr.bf16.mxu0 0
          %1847 = vmatpush1.bf16.msra.mxu0 0
          %1848 = vmatprep.subr.bf16.mxu0 0
          %1849 = vmatpush1.bf16.msra.mxu0 0
          %1850 = vmatprep.subr.bf16.mxu0 0
          %1851 = vmatpush1.bf16.msra.mxu0 0
          %1852 = vmatprep.subr.bf16.mxu0 0
          %1853 = vmatpush1.bf16.msra.mxu0 0
          %1854 = vmatprep.subr.bf16.mxu0 0
          %1855 = vmatpush1.bf16.msra.mxu0 0
          %1856 = vmatprep.subr.bf16.mxu0 0
          %1857 = vmatpush1.bf16.msra.mxu0 0
          %1858 = vmatprep.subr.bf16.mxu0 0
          %1859 = vmatpush1.bf16.msra.mxu0 0
          %1860 = vmatprep.subr.bf16.mxu0 0
          %1861 = vmatpush1.bf16.msra.mxu0 0
          %1862 = vmatprep.subr.bf16.mxu0 0
          %1863 = vmatpush1.bf16.msra.mxu0 0
          %1864 = vmatprep.subr.bf16.mxu0 0
          %1865 = vmatpush1.bf16.msra.mxu0 0
          %1866 = vmatprep.subr.bf16.mxu0 0
          %1867 = vmatpush1.bf16.msra.mxu0 0
          %1868 = vmatprep.mubr.bf16.mxu0 0
          %1869 = vmatmul.mubr.bf16.gmra.mrb[0].mxu0 %v1834
          %v1870 = vpop.f32.mrb[0].mxu0
          %v1871 = vadd.f32 %v1820, %v1870
          %v1872 = vpop.f32.mrb[0].mxu0
          %v1873 = vpop.f32.mrb[0].mxu0
          %v1874 = vadd.f32 %v1820, %v1873
          %v1875 = vpop.f32.mrb[0].mxu0
          %1876 = vdwg.mxu0
          %v1877 = vmul.f32 %v1871, %v1871
          %v1878 = vmul.f32 %v1874, %v1874
          %v1879 = vmul.f32 %v1871, %v1877
          %v1880 = vmul.f32 %v1874, %v1878
          %v1881 = vmul.f32 %v1879, 0.044715
          %v1882 = vmul.f32 %v1880, 0.044715
          %v1883 = vadd.f32 %v1871, %v1881
          %v1884 = vadd.f32 %v1874, %v1882
          %v1885 = vmul.f32 %v1883, 0.7978846
          %v1886 = vmul.f32 %v1884, 0.7978846
          %v1887 = vtanh.pop %v1885
          %v1888 = vtanh.pop %v1886
          %v1889 = vadd.f32 %v1887, 1.0
          %v1890 = vadd.f32 %v1888, 1.0
          %v1891 = vmul.f32 %v1889, 0.5
          %v1892 = vmul.f32 %v1890, 0.5
          %v1893 = vmul.f32 %v1871, %v1891
          %v1894 = vmul.f32 %v1874, %v1892
          %v1895 = vpack.c.bf16 %v1894, %v1893
          %s1896 = smul.addr %s803, 4
          %s1897 = scalar_lea.vmem %s6, %s1896
          %v1898 = vld [vmem:[%s1897] sm:$0xf]
          %v1899 = vld [vmem:[%s1897 + $0x4] sm:$0xf]
          %v1900 = vld [vmem:[%s1897 + $0x8] sm:$0xf]
          %v1901 = vld [vmem:[%s1897 + $0xc] sm:$0xf]
          %v1902 = vld [vmem:[%s1897 + $0x10] sm:$0xf]
          %v1903 = vld [vmem:[%s1897 + $0x14] sm:$0xf]
          %v1904 = vld [vmem:[%s1897 + $0x18] sm:$0xf]
          %v1905 = vld [vmem:[%s1897 + $0x1c] sm:$0xf]
          %v1906 = vld [vmem:[%s1897 + $0x20] sm:$0xf]
          %v1907 = vld [vmem:[%s1897 + $0x24] sm:$0xf]
          %v1908 = vld [vmem:[%s1897 + $0x28] sm:$0xf]
          %v1909 = vld [vmem:[%s1897 + $0x2c] sm:$0xf]
          %v1910 = vld [vmem:[%s1897 + $0x30] sm:$0xf]
          %v1911 = vld [vmem:[%s1897 + $0x34] sm:$0xf]
          %v1912 = vld [vmem:[%s1897 + $0x38] sm:$0xf]
          %v1913 = vld [vmem:[%s1897 + $0x3c] sm:$0xf]
          %v1914 = vld [vmem:[%s804 + $0x6] sm:$0x1]
          %v1915 = vlaneseq
          %v1916 = vshrl.u32 %v1915, 7
          %v1917 = vsub.s32 0, %v1916
          %v1918 = vrot.slane %v1914, %v1917
          %v1935 = vunpack.c.l.b16 %v1898
          %v1936 = vunpack.c.l.b16 %v1899
          %v1937 = vunpack.c.l.b16 %v1900
          %v1938 = vunpack.c.l.b16 %v1901
          %v1939 = vunpack.c.l.b16 %v1902
          %v1940 = vunpack.c.l.b16 %v1903
          %v1941 = vunpack.c.l.b16 %v1904
          %v1942 = vunpack.c.l.b16 %v1905
          %v1943 = vunpack.c.l.b16 %v1906
          %v1944 = vunpack.c.l.b16 %v1907
          %v1945 = vunpack.c.l.b16 %v1908
          %v1946 = vunpack.c.l.b16 %v1909
          %v1947 = vunpack.c.l.b16 %v1910
          %v1948 = vunpack.c.l.b16 %v1911
          %v1949 = vunpack.c.l.b16 %v1912
          %v1950 = vunpack.c.l.b16 %v1913
          %v1951 = vpack.c.b16 %v1936, %v1935
          %v1952 = vpack.c.b16 %v1938, %v1937
          %v1953 = vpack.c.b16 %v1940, %v1939
          %v1954 = vpack.c.b16 %v1942, %v1941
          %v1955 = vpack.c.b16 %v1944, %v1943
          %v1956 = vpack.c.b16 %v1946, %v1945
          %v1957 = vpack.c.b16 %v1948, %v1947
          %v1958 = vpack.c.b16 %v1950, %v1949
          %1967 = vmatprep.subr.bf16.mxu0 0
          %1968 = vmatpush1.bf16.msra.mxu0 %v1951
          %1969 = vmatprep.subr.bf16.mxu0 0
          %1970 = vmatpush1.bf16.msra.mxu0 %v1952
          %1971 = vmatprep.subr.bf16.mxu0 0
          %1972 = vmatpush1.bf16.msra.mxu0 %v1953
          %1973 = vmatprep.subr.bf16.mxu0 0
          %1974 = vmatpush1.bf16.msra.mxu0 %v1954
          %1975 = vmatprep.subr.bf16.mxu0 0
          %1976 = vmatpush1.bf16.msra.mxu0 %v1955
          %1977 = vmatprep.subr.bf16.mxu0 0
          %1978 = vmatpush1.bf16.msra.mxu0 %v1956
          %1979 = vmatprep.subr.bf16.mxu0 0
          %1980 = vmatpush1.bf16.msra.mxu0 %v1957
          %1981 = vmatprep.subr.bf16.mxu0 0
          %1982 = vmatpush1.bf16.msra.mxu0 %v1958
          %1983 = vmatprep.subr.bf16.mxu0 0
          %1984 = vmatpush1.bf16.msra.mxu0 0
          %1985 = vmatprep.subr.bf16.mxu0 0
          %1986 = vmatpush1.bf16.msra.mxu0 0
          %1987 = vmatprep.subr.bf16.mxu0 0
          %1988 = vmatpush1.bf16.msra.mxu0 0
          %1989 = vmatprep.subr.bf16.mxu0 0
          %1990 = vmatpush1.bf16.msra.mxu0 0
          %1991 = vmatprep.subr.bf16.mxu0 0
          %1992 = vmatpush1.bf16.msra.mxu0 0
          %1993 = vmatprep.subr.bf16.mxu0 0
          %1994 = vmatpush1.bf16.msra.mxu0 0
          %1995 = vmatprep.subr.bf16.mxu0 0
          %1996 = vmatpush1.bf16.msra.mxu0 0
          %1997 = vmatprep.subr.bf16.mxu0 0
          %1998 = vmatpush1.bf16.msra.mxu0 0
          %1999 = vmatprep.mubr.bf16.mxu0 0
          %2000 = vmatmul.mubr.bf16.gmra.mrb[0].mxu0 %v1895
          %v2001 = vpop.f32.mrb[0].mxu0
          %v2002 = vadd.f32 %v1918, %v2001
          %v2003 = vpop.f32.mrb[0].mxu0
          %v2004 = vpop.f32.mrb[0].mxu0
          %v2005 = vadd.f32 %v1918, %v2004
          %v2006 = vpop.f32.mrb[0].mxu0
          %2007 = vdwg.mxu0
          %v2008 = vld [vmem:[%s804 + $0x7] sm:$0x1]
          %v2009 = vlaneseq
          %v2010 = vshrl.u32 %v2009, 7
          %v2011 = vsub.s32 0, %v2010
          %v2012 = vrot.slane %v2008, %v2011
          %v2013 = vmul.f32 %v2002, %v2012
          %v2014 = vmul.f32 %v2005, %v2012
          %v2015 = vadd.f32 %v1766, %v2013
          %v2016 = vadd.f32 %v1767, %v2014
          %2017 = vst.msk [vmem:[#allocation2] sm:$0xff] %vm791, %v2015
          %2018 = vst.msk [vmem:[#allocation2 + $0x8] sm:$0x1] %vm793, %v2016
        $region61: #{dinov2_patch_tokens.1} parent=55 // loop_footer
          %s800 = sadd.s32 1, %s796
        $region62: #{dinov2_patch_tokens.1} parent=55 // loop_footer_branch
          %795 = sbr.rel target = $region58
        $region63: #{dinov2_patch_tokens.1} parent=55 // loop_exit
          _
        %v2019 = vld [vmem:[#allocation2 + $0x5] sm:$0xf]
        %v2020 = vld [vmem:[%s8] sm:$0x1]
        %v2021 = vld [vmem:[%s8 + $0x1] sm:$0x1]
        %vm2022 = vcmask 257024
        %v2023 = vsel %vm2022, %v2019, 0.0
        %2024 = vadd.xlane.f32.xlu0 %v2023
        %v2025 = vpop.xlane.xlu0 %2024
        %v2026 = vrcp.pop 32.0
        %v2027 = vmul.f32 %v2025, %v2026
        %v2028 = vsub.f32 %v2019, %v2027
        %v2029 = vmul.f32 %v2028, %v2028
        %v2030 = vsel %vm2022, %v2029, 0.0
        %2031 = vadd.xlane.f32.xlu0 %v2030
        %v2032 = vpop.xlane.xlu0 %2031
        %v2033 = vmul.f32 %v2032, %v2026
        %v2034 = vadd.f32 %v2033, 1e-06
        %v2035 = vrsqrt.pop %v2034
        %v2036 = vmul.f32 %v2028, %v2035
        %v2037 = vlaneseq
        %v2038 = vshrl.u32 %v2037, 7
        %v2039 = vsub.s32 0, %v2038
        %v2040 = vrot.slane %v2020, %v2039
        %v2041 = vmul.f32 %v2036, %v2040
        %v2042 = vlaneseq
        %v2043 = vshrl.u32 %v2042, 7
        %v2044 = vsub.s32 0, %v2043
        %v2045 = vrot.slane %v2021, %v2044
        %v2046 = vadd.f32 %v2041, %v2045
        %2047 = vst.msk [vmem:[%s325] sm:$0xf] %vm2022, %v2046
        %s2048 = sand.u32 %s225, 1
        %s2049 = scalar_lea.sflag [#allocation4], %s2048
        %s2050 = sand.u32 %s225, 1
        %s2051 = smul.addr %s2050, 4
        %s2052 = scalar_lea.vmem [#allocation3], %s2051
        // Predicated region
        $region64: #{dinov2_patch_tokens.1} parent=55 // pred_check
          %p2053 = pneg %p235
        $region65: #{dinov2_patch_tokens.1} parent=55 // pred_check_branch
          %2055 = sbr.rel (%p2053) target = $region67
        $region66: #{dinov2_patch_tokens.1} parent=55 // pred_region
          %s2057 = ssub.s32 64, 64
          %2058 = vsyncadd %s2049, %s2057
          %s2059 = smul.addr %s23, 64
          %s2060 = scalar_lea.hbm %s9, %s2059
          %s2062 = sshll.u32 %s2052, 4
          %s2063 = int_to_ptr.vmem [resolvable:$true] %s2062
          %2065 = dma.vmem_to_hbm [thread:$0]  %s2063, 64, %s2060, %s2049
        $region67: #{dinov2_patch_tokens.1} parent=55 // pred_fallthru
          _
      $region56: #{dinov2_patch_tokens.1} parent=5 // pred_fallthru
        _
      %p2066 = scmp.le.s32.totalorder 2, %s18
      // Predicated region
      $region68: #{dinov2_patch_tokens.1} parent=5 // pred_check
        %p2067 = pneg %p2066
      $region69: #{dinov2_patch_tokens.1} parent=5 // pred_check_branch
        %2069 = sbr.rel (%p2067) target = $region71
      $region70: #{dinov2_patch_tokens.1} parent=5 // pred_region
        %s2070 = ssub.s32 %s18, 2
        // Predicated region
        $region72: #{dinov2_patch_tokens.1} parent=70 // pred_check
          %p2071 = pneg %p241
        $region73: #{dinov2_patch_tokens.1} parent=70 // pred_check_branch
          %2073 = sbr.rel (%p2071) target = $region75
        $region74: #{dinov2_patch_tokens.1} parent=70 // pred_region
          %s2074 = sand.u32 %s226, 1
          %s2075 = scalar_lea.sflag [#allocation4], %s2074
          %s2076 = sand.u32 %s226, 1
          %s2077 = smul.addr %s2076, 4
          %s2078 = scalar_lea.vmem [#allocation3], %s2077
          %2079 = dma.done %s2075, 64
        $region75: #{dinov2_patch_tokens.1} parent=70 // pred_fallthru
          _
      $region71: #{dinov2_patch_tokens.1} parent=5 // pred_fallthru
        _
    $region6: #{dinov2_patch_tokens.1} parent=1 // loop_footer
      %s22 = sadd.s32 1, %s18
    $region7: #{dinov2_patch_tokens.1} parent=1 // loop_footer_branch
      %17 = sbr.rel target = $region3
    $region8: #{dinov2_patch_tokens.1} parent=1 // loop_exit
      _
    %2080 = vsyncpa [#allocation4], 1
    %s2081 = scalar_lea.sflag [#allocation4], 1
    %2082 = vsyncpa %s2081, 1

</llo_original>
